<compile_context>
chip_gen: v7x
topology: tpu7x:2x2x1
jax: 0.10.0
libtpu: 0.0.40
codegen_flags: <defaults>
</compile_context>

<pallas_src>
import functools
import math

import jax
import jax.numpy as jnp
from jax import lax
from jax.experimental import pallas as pl
from jax.experimental.pallas import tpu as pltpu


def _round_up(n: int, m: int) -> int:
    return ((n + m - 1) // m) * m


def _disc_kernel(x_ref, w1_ref, b1_ref, w2_ref, b2_ref, o_ref):
    # x_ref : (TB, D)  f32/bf16  streamed batch tile (cast to bf16 in-kernel)
    # w1_ref: (D, H)   bf16      resident
    # b1_ref: (1, H)   f32       resident
    # w2_ref: (8, H)   f32       resident (row 0 = real w2, rows 1..7 = zero)
    # b2_ref: (1,)     f32       SMEM scalar
    # o_ref : (1, TB)  f32       lane-dense output tile (batch on lanes)

    # Layer 1 on the MXU: bf16 x bf16 -> f32 accumulation. The cast happens
    # here so the HBM stream of x is a single pass in its producer dtype.
    x = x_ref[...].astype(jnp.bfloat16)
    h = jnp.dot(x, w1_ref[...], preferred_element_type=jnp.float32)
    h = h + b1_ref[...]
    h = jnp.maximum(h, 0.1 * h)                  # LeakyReLU(0.1) on the VPU

    # Layer 2 as a transposed contraction: (8, H) . (TB, H)^T -> (8, TB).
    # Only row 0 is meaningful; the 8-row pad keeps a full sublane tile of
    # MXU rows and yields a lane-dense result (batch on lanes).
    z = lax.dot_general(
        w2_ref[...], h,
        dimension_numbers=(((1,), (1,)), ((), ())),
        preferred_element_type=jnp.float32,
    )
    z = z[0:1, :] + b2_ref[0]                    # (1, TB)

    # Sigmoid: exp on the EUP, approximate reciprocal instead of an f32 divide.
    o_ref[...] = pl.reciprocal(1.0 + jnp.exp(-z), approx=True).astype(o_ref.dtype)


@functools.partial(jax.jit, static_argnames=("tile_b",))
def discriminator_forward(x, w1, b1, w2, b2, *, tile_b: int = 1024):
    """Discriminator forward pass.

    x: (B, D); w1: (D, H); b1: (1, H); w2: (H, 1); b2: (1, 1).
    Returns sigmoid probabilities, shape (B, 1), float32.
    """
    B, D = x.shape
    H = w1.shape[1]

    # Lane-dense batch tile: a multiple of 128, capped at `tile_b`; a single
    # tile when B is small. (On v7x prefer tile_b such that there are >= 2
    # tiles so both TensorCores get work; for large B the default gives many.)
    tb = min(_round_up(tile_b, 128), _round_up(B, 128))
    nb = pl.cdiv(B, tb)   # partial last block handled by Pallas (no jnp.pad)

    # Small, one-time weight preps (do not scale with batch).
    w1b = jnp.asarray(w1, jnp.bfloat16)
    b1f = jnp.asarray(b1, jnp.float32).reshape(1, H)
    # Pad w2 (H, 1) -> (8, H): row 0 is the real weight vector.
    w2p = jnp.zeros((8, H), jnp.float32).at[0, :].set(
        jnp.asarray(w2, jnp.float32).reshape(H))
    b2s = jnp.asarray(b2, jnp.float32).reshape(1)

    # VMEM budget, generation-aware (v7x: 64 MiB/TC; v5e/v6e: 128 MiB).
    # The x tile lane-pads D -> round_up(D, 128) and is double-buffered.
    d_pad = _round_up(D, 128)
    x_bytes = jnp.dtype(x.dtype).itemsize
    vmem_need = (
        2 * tb * d_pad * x_bytes            # x tile, double-buffered
        + 2 * (D * H * 2)                   # w1 (bf16), double-buffered resident
        + 2 * (8 * H * 4 + 8 * H * 4)       # b1 / w2_pad (sublane-padded f32)
        + 2 * (8 * tb * 4)                  # (1, tb) out block pads to 8 sublanes
    )
    vmem_limit = int(min(max(2 * vmem_need, 16 << 20), 40 << 20))
    vmem_limit = max(vmem_limit, vmem_need + (2 << 20))   # never under-provision

    out = pl.pallas_call(
        _disc_kernel,
        out_shape=jax.ShapeDtypeStruct((1, B), jnp.float32),
        grid=(nb,),
        in_specs=[
            pl.BlockSpec((tb, D), lambda i: (i, 0)),            # x: streamed tiles
            pl.BlockSpec((D, H), lambda i: (0, 0)),             # w1: resident
            pl.BlockSpec((1, H), lambda i: (0, 0)),             # b1: resident
            pl.BlockSpec((8, H), lambda i: (0, 0)),             # w2 (padded): resident
            pl.BlockSpec(memory_space=pltpu.MemorySpace.SMEM),  # b2: SMEM scalar
        ],
        out_specs=pl.BlockSpec((1, tb), lambda i: (0, i)),      # lane-dense output
        compiler_params=pltpu.CompilerParams(
            dimension_semantics=("parallel",),
            vmem_limit_bytes=vmem_limit,
        ),
    )(x, w1b, b1f, w2p, b2s)

    # (1, B) lane-dense -> (B, 1) column (matches nn.Linear(128, 1) output).
    return out[0, :].reshape(B, 1)


def init_params(key, img_dim, hidden=128):
    """Deterministic init mimicking torch.nn.Linear (uniform +/- 1/sqrt(fan_in))."""
    k1, k2, k3, k4 = jax.random.split(key, 4)
    bound1 = 1.0 / math.sqrt(img_dim)
    bound2 = 1.0 / math.sqrt(hidden)
    w1 = jax.random.uniform(k1, (img_dim, hidden), jnp.float32, -bound1, bound1)
    b1 = jax.random.uniform(k2, (1, hidden), jnp.float32, -bound1, bound1)
    w2 = jax.random.uniform(k3, (hidden, 1), jnp.float32, -bound2, bound2)
    b2 = jax.random.uniform(k4, (1, 1), jnp.float32, -bound2, bound2)
    return w1, b1, w2, b2


if __name__ == "__main__":
    key = jax.random.PRNGKey(0)
    k_x, k_p = jax.random.split(key)

    # MNIST-flavoured Discriminator: img_dim = 28*28 = 784, hidden = 128.
    # B = 300 exercises a partial (non-multiple-of-128) batch without padding.
    B, IMG_DIM, HIDDEN = 300, 784, 128
    x = jax.random.normal(k_x, (B, IMG_DIM), jnp.float32)
    w1, b1, w2, b2 = init_params(k_p, IMG_DIM, HIDDEN)

    # Default tiling: B < 1024 -> single 384-row tile (partial block).
    out = discriminator_forward(x, w1, b1, w2, b2)
    out = jax.block_until_ready(out)
    assert out.shape == (B, 1)

    # Multi-tile grid with a partial tail block (2 tiles of 256, tail = 44 rows).
    out_mt = discriminator_forward(x, w1, b1, w2, b2, tile_b=256)
    out_mt = jax.block_until_ready(out_mt)
    assert out_mt.shape == (B, 1)

    # Pure-JAX reference with the same bf16 rounding of the layer-1 operands.
    xr = x.astype(jnp.bfloat16).astype(jnp.float32)
    w1r = w1.astype(jnp.bfloat16).astype(jnp.float32)
    h_ref = xr @ w1r + b1
    h_ref = jnp.where(h_ref >= 0.0, h_ref, 0.1 * h_ref)
    ref = jax.nn.sigmoid(h_ref @ w2 + b2)

    err = float(jnp.max(jnp.abs(out - ref)))
    err_mt = float(jnp.max(jnp.abs(out_mt - ref)))
    assert err < 5e-3, f"max abs err {err}"
    assert err_mt < 5e-3, f"max abs err (multi-tile) {err_mt}"
    print("KERNEL_OK")
</pallas_src>

<mosaic_0001>
module attributes {stable_mosaic.version = 11 : i64} {
  func.func @_disc_kernel(%arg0: i32, %arg1: memref<384x784xf32, #tpu.memory_space<vmem>>, %arg2: memref<784x128xbf16, #tpu.memory_space<vmem>>, %arg3: memref<1x128xf32, #tpu.memory_space<vmem>>, %arg4: memref<8x128xf32, #tpu.memory_space<vmem>>, %arg5: memref<1xf32, #tpu.memory_space<smem>>, %arg6: memref<1x384xf32, #tpu.memory_space<vmem>>) attributes {dimension_semantics = [#tpu.dimension_semantics<parallel>], iteration_bounds = array<i64: 1>, scalar_prefetch = 0 : i64, scratch_operands = 0 : i64, tpu.core_type = #tpu.core_type<tc>, window_params = [{transform_indices = @transform_0, window_bounds = array<i64: 384, 784>}, {pipeline_mode = #tpu.pipeline_mode<synchronous>, transform_indices = @transform_1, window_bounds = array<i64: 784, 128>}, {pipeline_mode = #tpu.pipeline_mode<synchronous>, transform_indices = @transform_2, window_bounds = array<i64: 1, 128>}, {pipeline_mode = #tpu.pipeline_mode<synchronous>, transform_indices = @transform_3, window_bounds = array<i64: 8, 128>}, {transform_indices = @transform_4, window_bounds = array<i64: 1>}, {transform_indices = @transform_5, window_bounds = array<i64: 1, 384>}]} {
    %c0 = arith.constant 0 : index
    %c0_0 = arith.constant 0 : index
    %0 = vector.load %arg1[%c0, %c0_0] : memref<384x784xf32, #tpu.memory_space<vmem>>, vector<384x784xf32>
    %1 = arith.truncf %0 : vector<384x784xf32> to vector<384x784xbf16>
    %c0_1 = arith.constant 0 : index
    %c0_2 = arith.constant 0 : index
    %2 = vector.load %arg2[%c0_1, %c0_2] : memref<784x128xbf16, #tpu.memory_space<vmem>>, vector<784x128xbf16>
    %cst = arith.constant dense<0.000000e+00> : vector<384x128xf32>
    %3 = tpu.matmul %1, %2, %cst {dimension_numbers = #tpu.dot_dimension_numbers<[1], [0], [0], [1], [0, 0, 1, 1], [], []>} : vector<384x784xbf16>, vector<784x128xbf16>, vector<384x128xf32> -> vector<384x128xf32>
    %c0_3 = arith.constant 0 : index
    %c0_4 = arith.constant 0 : index
    %4 = vector.load %arg3[%c0_3, %c0_4] : memref<1x128xf32, #tpu.memory_space<vmem>>, vector<1x128xf32>
    %5 = vector.broadcast %4 : vector<1x128xf32> to vector<384x128xf32>
    %6 = arith.addf %3, %5 : vector<384x128xf32>
    %cst_5 = arith.constant 1.000000e-01 : f32
    %7 = vector.broadcast %cst_5 : f32 to vector<384x128xf32>
    %8 = arith.mulf %7, %6 : vector<384x128xf32>
    %9 = arith.maximumf %6, %8 : vector<384x128xf32>
    %c0_6 = arith.constant 0 : index
    %c0_7 = arith.constant 0 : index
    %10 = vector.load %arg4[%c0_6, %c0_7] : memref<8x128xf32, #tpu.memory_space<vmem>>, vector<8x128xf32>
    %cst_8 = arith.constant dense<0.000000e+00> : vector<8x384xf32>
    %11 = tpu.matmul %10, %9, %cst_8 {dimension_numbers = #tpu.dot_dimension_numbers<[1], [1], [0], [0], [0, 0, 1, 0], [], []>} : vector<8x128xf32>, vector<384x128xf32>, vector<8x384xf32> -> vector<8x384xf32>
    %12 = vector.extract_strided_slice %11 {offsets = [0, 0], sizes = [1, 384], strides = [1, 1]} : vector<8x384xf32> to vector<1x384xf32>
    %c0_9 = arith.constant 0 : index
    %13 = memref.load %arg5[%c0_9] : memref<1xf32, #tpu.memory_space<smem>>
    %14 = vector.broadcast %13 : f32 to vector<1x384xf32>
    %15 = arith.addf %12, %14 : vector<1x384xf32>
    %cst_10 = arith.constant 0.000000e+00 : f32
    %16 = vector.broadcast %cst_10 : f32 to vector<1x384xf32>
    %17 = arith.subf %16, %15 : vector<1x384xf32>
    %18 = math.exp %17 : vector<1x384xf32>
    %cst_11 = arith.constant 1.000000e+00 : f32
    %19 = vector.broadcast %cst_11 : f32 to vector<1x384xf32>
    %20 = arith.addf %19, %18 : vector<1x384xf32>
    %21 = tpu.reciprocal %20 {approx = true} : vector<1x384xf32> -> vector<1x384xf32>
    %c0_12 = arith.constant 0 : index
    %c0_13 = arith.constant 0 : index
    %22 = vector.load %arg6[%c0_12, %c0_13] : memref<1x384xf32, #tpu.memory_space<vmem>>, vector<1x384xf32>
    tpu.vector_store %arg6[%c0_12, %c0_13], %21 {strides = array<i32>} : memref<1x384xf32, #tpu.memory_space<vmem>>, vector<1x384xf32>,
    return
  }
  func.func @transform_0(%arg0: i32) -> (i32, i32) {
    %c0_i32 = arith.constant 0 : i32
    %c0_i32_0 = arith.constant 0 : i32
    return %arg0, %c0_i32 : i32, i32
  }
  func.func @transform_1(%arg0: i32) -> (i32, i32) {
    %c0_i32 = arith.constant 0 : i32
    %c0_i32_0 = arith.constant 0 : i32
    %c0_i32_1 = arith.constant 0 : i32
    return %c0_i32, %c0_i32_0 : i32, i32
  }
  func.func @transform_2(%arg0: i32) -> (i32, i32) {
    %c0_i32 = arith.constant 0 : i32
    %c0_i32_0 = arith.constant 0 : i32
    %c0_i32_1 = arith.constant 0 : i32
    return %c0_i32, %c0_i32_0 : i32, i32
  }
  func.func @transform_3(%arg0: i32) -> (i32, i32) {
    %c0_i32 = arith.constant 0 : i32
    %c0_i32_0 = arith.constant 0 : i32
    %c0_i32_1 = arith.constant 0 : i32
    return %c0_i32, %c0_i32_0 : i32, i32
  }
  func.func @transform_4(%arg0: i32) -> i32 {
    %c0_i32 = arith.constant 0 : i32
    %c0_i32_0 = arith.constant 0 : i32
    return %c0_i32 : i32
  }
  func.func @transform_5(%arg0: i32) -> (i32, i32) {
    %c0_i32 = arith.constant 0 : i32
    %c0_i32_0 = arith.constant 0 : i32
    return %c0_i32, %arg0 : i32, i32
  }
}

</mosaic_0001>

<llo_original>
// kernel: discriminator_forward.1
$region0: #{discriminator_forward.1}
  #allocation0 [shape = 'u32[]', space=smem, size = 0x4, offset = 0x4, fixed_abs, tag = 'smem constant byte address 0x4 - core index']
  #allocation1 [shape = 'u32[144,128]{1,0:T(1,128)}', space=vmem, size = 0x12000, scoped, tag = 'internal scratch']
  #allocation2 [shape = 'f32[1]{0:T(128)S(6)}', space=smem, size = 0x200, scoped, tag = 'scoped memory for discriminator_forward.1']
  %s0 = inlined_call_operand.hbm [shape: f32[300,784], index: 0, kind: input, shape index: {}]
  %s1 = inlined_call_operand.vmem [shape: bf16[784,128], index: 1, kind: input, shape index: {}]
  %s2 = inlined_call_operand.hbm [shape: f32[1,128], index: 2, kind: input, shape index: {}]
  %s3 = inlined_call_operand.vmem [shape: f32[8,128], index: 3, kind: input, shape index: {}]
  %s4 = inlined_call_operand.<no memory space> [shape: f32[1], index: 4, kind: input, shape index: {}]
  %s5 = inlined_call_operand.hbm [shape: f32[1,300], index: 5, kind: output, shape index: {}]
  %s6 = sld [smem:[#allocation0]]
  $region38: #{discriminator_forward.1} parent=0
    _
  %s8 = ssub.s32 1, %s6
  %s9 = scalar_select 0, %s8, %s6
  %10 = sst [smem:[#allocation2]] %s4
  $region1: #{discriminator_forward.1} parent=0
    #allocation3 [shape = 'u8[1376256]{0}', space=vmem, size = 0x150000, scoped, tag = 'input window, operand 0, single buffered']
    #allocation4 [shape = 's32[1]{0}', space=sflag, size = 0x4, scoped, tag = 'scoped memory for discriminator_forward.1']
    #allocation5 [shape = 's32[1]{0}', space=sflag, size = 0x4, scoped, tag = 'scoped memory for discriminator_forward.1']
    #allocation6 [shape = 'u8[512]{0}', space=vmem, size = 0x400, scoped, tag = 'input window, operand 2, single buffered']
    #allocation7 [shape = 's32[1]{0}', space=sflag, size = 0x4, scoped, tag = 'scoped memory for discriminator_forward.1']
    #allocation8 [shape = 'u8[1536]{0}', space=vmem, size = 0x800, scoped, tag = 'output window, operand 0, single buffered']
    %11 = vsyncpa [#allocation4], 0
    %12 = vsyncpa [#allocation7], 0
    %13 = vsyncpa [#allocation5], 0
    // Predicated region
    $region2: #{discriminator_forward.1} parent=1 // pred_check
      _
    $region3: #{discriminator_forward.1} parent=1 // pred_check_branch
      %15 = sbr.rel (0) target = $region5
    $region4: #{discriminator_forward.1} parent=1 // pred_region
      %s17 = ssub.s32 43008, 34048
      %18 = vsyncadd [#allocation4], %s17
      %s19 = sshll.u32 [#allocation3], 4
      %s20 = int_to_ptr.vmem [resolvable:$true] %s19
      %25 = dma.hbm_to_vmem [thread:$0]  %s0, 34048, %s20, [#allocation4], 896, 896, 56
    $region5: #{discriminator_forward.1} parent=1 // pred_fallthru
      _
    // Predicated region
    $region6: #{discriminator_forward.1} parent=1 // pred_check
      _
    $region7: #{discriminator_forward.1} parent=1 // pred_check_branch
      %27 = sbr.rel (0) target = $region9
    $region8: #{discriminator_forward.1} parent=1 // pred_region
      _
    $region9: #{discriminator_forward.1} parent=1 // pred_fallthru
      _
    // Predicated region
    $region10: #{discriminator_forward.1} parent=1 // pred_check
      _
    $region11: #{discriminator_forward.1} parent=1 // pred_check_branch
      %29 = sbr.rel (0) target = $region13
    $region12: #{discriminator_forward.1} parent=1 // pred_region
      %s31 = ssub.s32 16, 16
      %32 = vsyncadd [#allocation7], %s31
      %s34 = sshll.u32 [#allocation6], 4
      %s35 = int_to_ptr.vmem [resolvable:$true] %s34
      %37 = dma.hbm_to_vmem [thread:$0]  %s2, 16, %s35, [#allocation7]
    $region13: #{discriminator_forward.1} parent=1 // pred_fallthru
      _
    // Predicated region
    $region14: #{discriminator_forward.1} parent=1 // pred_check
      _
    $region15: #{discriminator_forward.1} parent=1 // pred_check_branch
      %39 = sbr.rel (0) target = $region17
    $region16: #{discriminator_forward.1} parent=1 // pred_region
      _
    $region17: #{discriminator_forward.1} parent=1 // pred_fallthru
      _
    // Predicated region
    $region18: #{discriminator_forward.1} parent=1 // pred_check
      _
    $region19: #{discriminator_forward.1} parent=1 // pred_check_branch
      %41 = sbr.rel (0) target = $region21
    $region20: #{discriminator_forward.1} parent=1 // pred_region
      _
    $region21: #{discriminator_forward.1} parent=1 // pred_fallthru
      _
    // Predicated region
    $region22: #{discriminator_forward.1} parent=1 // pred_check
      _
    $region23: #{discriminator_forward.1} parent=1 // pred_check_branch
      %43 = sbr.rel (0) target = $region25
    $region24: #{discriminator_forward.1} parent=1 // pred_region
      %44 = dma.done [#allocation4], 43008
    $region25: #{discriminator_forward.1} parent=1 // pred_fallthru
      _
    // Predicated region
    $region26: #{discriminator_forward.1} parent=1 // pred_check
      _
    $region27: #{discriminator_forward.1} parent=1 // pred_check_branch
      %46 = sbr.rel (0) target = $region29
    $region28: #{discriminator_forward.1} parent=1 // pred_region
      %47 = dma.done [#allocation7], 16
    $region29: #{discriminator_forward.1} parent=1 // pred_fallthru
      _
    %v49 = vld [vmem:[#allocation3] sm:$0xff]
    %v50 = vld [vmem:[#allocation3 + $0x8] sm:$0xff]
    %v51 = vld [vmem:[#allocation3 + $0x10] sm:$0xff]
    %v52 = vld [vmem:[#allocation3 + $0x18] sm:$0xff]
    %v53 = vld [vmem:[#allocation3 + $0x20] sm:$0xff]
    %v54 = vld [vmem:[#allocation3 + $0x28] sm:$0xff]
    %v55 = vld [vmem:[#allocation3 + $0x30] sm:$0xff]
    %v56 = vld [vmem:[#allocation3 + $0x38] sm:$0xff]
    %v57 = vld [vmem:[#allocation3 + $0x40] sm:$0xff]
    %v58 = vld [vmem:[#allocation3 + $0x48] sm:$0xff]
    %v59 = vld [vmem:[#allocation3 + $0x50] sm:$0xff]
    %v60 = vld [vmem:[#allocation3 + $0x58] sm:$0xff]
    %v61 = vld [vmem:[#allocation3 + $0x60] sm:$0xff]
    %v62 = vld [vmem:[#allocation3 + $0x68] sm:$0xff]
    %v63 = vld [vmem:[#allocation3 + $0x70] sm:$0xff]
    %v64 = vld [vmem:[#allocation3 + $0x78] sm:$0xff]
    %v65 = vld [vmem:[#allocation3 + $0x80] sm:$0xff]
    %v66 = vld [vmem:[#allocation3 + $0x88] sm:$0xff]
    %v67 = vld [vmem:[#allocation3 + $0x90] sm:$0xff]
    %v68 = vld [vmem:[#allocation3 + $0x98] sm:$0xff]
    %v69 = vld [vmem:[#allocation3 + $0xa0] sm:$0xff]
    %v70 = vld [vmem:[#allocation3 + $0xa8] sm:$0xff]
    %v71 = vld [vmem:[#allocation3 + $0xb0] sm:$0xff]
    %v72 = vld [vmem:[#allocation3 + $0xb8] sm:$0xff]
    %v73 = vld [vmem:[#allocation3 + $0xc0] sm:$0xff]
    %v74 = vld [vmem:[#allocation3 + $0xc8] sm:$0xff]
    %v75 = vld [vmem:[#allocation3 + $0xd0] sm:$0xff]
    %v76 = vld [vmem:[#allocation3 + $0xd8] sm:$0xff]
    %v77 = vld [vmem:[#allocation3 + $0xe0] sm:$0xff]
    %v78 = vld [vmem:[#allocation3 + $0xe8] sm:$0xff]
    %v79 = vld [vmem:[#allocation3 + $0xf0] sm:$0xff]
    %v80 = vld [vmem:[#allocation3 + $0xf8] sm:$0xff]
    %v81 = vld [vmem:[#allocation3 + $0x100] sm:$0xff]
    %v82 = vld [vmem:[#allocation3 + $0x108] sm:$0xff]
    %v83 = vld [vmem:[#allocation3 + $0x110] sm:$0xff]
    %v84 = vld [vmem:[#allocation3 + $0x118] sm:$0xff]
    %v85 = vld [vmem:[#allocation3 + $0x120] sm:$0xff]
    %v86 = vld [vmem:[#allocation3 + $0x128] sm:$0xff]
    %v87 = vld [vmem:[#allocation3 + $0x130] sm:$0xff]
    %v88 = vld [vmem:[#allocation3 + $0x138] sm:$0xff]
    %v89 = vld [vmem:[#allocation3 + $0x140] sm:$0xff]
    %v90 = vld [vmem:[#allocation3 + $0x148] sm:$0xff]
    %v91 = vld [vmem:[#allocation3 + $0x150] sm:$0xff]
    %v92 = vld [vmem:[#allocation3 + $0x158] sm:$0xff]
    %v93 = vld [vmem:[#allocation3 + $0x160] sm:$0xff]
    %v94 = vld [vmem:[#allocation3 + $0x168] sm:$0xff]
    %v95 = vld [vmem:[#allocation3 + $0x170] sm:$0xff]
    %v96 = vld [vmem:[#allocation3 + $0x178] sm:$0xff]
    %v97 = vld [vmem:[#allocation3 + $0x180] sm:$0xff]
    %v98 = vld [vmem:[#allocation3 + $0x188] sm:$0xff]
    %v99 = vld [vmem:[#allocation3 + $0x190] sm:$0xff]
    %v100 = vld [vmem:[#allocation3 + $0x198] sm:$0xff]
    %v101 = vld [vmem:[#allocation3 + $0x1a0] sm:$0xff]
    %v102 = vld [vmem:[#allocation3 + $0x1a8] sm:$0xff]
    %v103 = vld [vmem:[#allocation3 + $0x1b0] sm:$0xff]
    %v104 = vld [vmem:[#allocation3 + $0x1b8] sm:$0xff]
    %v105 = vld [vmem:[#allocation3 + $0x1c0] sm:$0xff]
    %v106 = vld [vmem:[#allocation3 + $0x1c8] sm:$0xff]
    %v107 = vld [vmem:[#allocation3 + $0x1d0] sm:$0xff]
    %v108 = vld [vmem:[#allocation3 + $0x1d8] sm:$0xff]
    %v109 = vld [vmem:[#allocation3 + $0x1e0] sm:$0xff]
    %v110 = vld [vmem:[#allocation3 + $0x1e8] sm:$0xff]
    %v111 = vld [vmem:[#allocation3 + $0x1f0] sm:$0xff]
    %v112 = vld [vmem:[#allocation3 + $0x1f8] sm:$0xff]
    %v113 = vld [vmem:[#allocation3 + $0x200] sm:$0xff]
    %v114 = vld [vmem:[#allocation3 + $0x208] sm:$0xff]
    %v115 = vld [vmem:[#allocation3 + $0x210] sm:$0xff]
    %v116 = vld [vmem:[#allocation3 + $0x218] sm:$0xff]
    %v117 = vld [vmem:[#allocation3 + $0x220] sm:$0xff]
    %v118 = vld [vmem:[#allocation3 + $0x228] sm:$0xff]
    %v119 = vld [vmem:[#allocation3 + $0x230] sm:$0xff]
    %v120 = vld [vmem:[#allocation3 + $0x238] sm:$0xff]
    %v121 = vld [vmem:[#allocation3 + $0x240] sm:$0xff]
    %v122 = vld [vmem:[#allocation3 + $0x248] sm:$0xff]
    %v123 = vld [vmem:[#allocation3 + $0x250] sm:$0xff]
    %v124 = vld [vmem:[#allocation3 + $0x258] sm:$0xff]
    %v125 = vld [vmem:[#allocation3 + $0x260] sm:$0xff]
    %v126 = vld [vmem:[#allocation3 + $0x268] sm:$0xff]
    %v127 = vld [vmem:[#allocation3 + $0x270] sm:$0xff]
    %v128 = vld [vmem:[#allocation3 + $0x278] sm:$0xff]
    %v129 = vld [vmem:[#allocation3 + $0x280] sm:$0xff]
    %v130 = vld [vmem:[#allocation3 + $0x288] sm:$0xff]
    %v131 = vld [vmem:[#allocation3 + $0x290] sm:$0xff]
    %v132 = vld [vmem:[#allocation3 + $0x298] sm:$0xff]
    %v133 = vld [vmem:[#allocation3 + $0x2a0] sm:$0xff]
    %v134 = vld [vmem:[#allocation3 + $0x2a8] sm:$0xff]
    %v135 = vld [vmem:[#allocation3 + $0x2b0] sm:$0xff]
    %v136 = vld [vmem:[#allocation3 + $0x2b8] sm:$0xff]
    %v137 = vld [vmem:[#allocation3 + $0x2c0] sm:$0xff]
    %v138 = vld [vmem:[#allocation3 + $0x2c8] sm:$0xff]
    %v139 = vld [vmem:[#allocation3 + $0x2d0] sm:$0xff]
    %v140 = vld [vmem:[#allocation3 + $0x2d8] sm:$0xff]
    %v141 = vld [vmem:[#allocation3 + $0x2e0] sm:$0xff]
    %v142 = vld [vmem:[#allocation3 + $0x2e8] sm:$0xff]
    %v143 = vld [vmem:[#allocation3 + $0x2f0] sm:$0xff]
    %v144 = vld [vmem:[#allocation3 + $0x2f8] sm:$0xff]
    %v145 = vld [vmem:[#allocation3 + $0x300] sm:$0xff]
    %v146 = vld [vmem:[#allocation3 + $0x308] sm:$0xff]
    %v147 = vld [vmem:[#allocation3 + $0x310] sm:$0xff]
    %v148 = vld [vmem:[#allocation3 + $0x318] sm:$0xff]
    %v149 = vld [vmem:[#allocation3 + $0x320] sm:$0xff]
    %v150 = vld [vmem:[#allocation3 + $0x328] sm:$0xff]
    %v151 = vld [vmem:[#allocation3 + $0x330] sm:$0xff]
    %v152 = vld [vmem:[#allocation3 + $0x338] sm:$0xff]
    %v153 = vld [vmem:[#allocation3 + $0x340] sm:$0xff]
    %v154 = vld [vmem:[#allocation3 + $0x348] sm:$0xff]
    %v155 = vld [vmem:[#allocation3 + $0x350] sm:$0xff]
    %v156 = vld [vmem:[#allocation3 + $0x358] sm:$0xff]
    %v157 = vld [vmem:[#allocation3 + $0x360] sm:$0xff]
    %v158 = vld [vmem:[#allocation3 + $0x368] sm:$0xff]
    %v159 = vld [vmem:[#allocation3 + $0x370] sm:$0xff]
    %v160 = vld [vmem:[#allocation3 + $0x378] sm:$0xff]
    %v161 = vld [vmem:[#allocation3 + $0x380] sm:$0xff]
    %v162 = vld [vmem:[#allocation3 + $0x388] sm:$0xff]
    %v163 = vld [vmem:[#allocation3 + $0x390] sm:$0xff]
    %v164 = vld [vmem:[#allocation3 + $0x398] sm:$0xff]
    %v165 = vld [vmem:[#allocation3 + $0x3a0] sm:$0xff]
    %v166 = vld [vmem:[#allocation3 + $0x3a8] sm:$0xff]
    %v167 = vld [vmem:[#allocation3 + $0x3b0] sm:$0xff]
    %v168 = vld [vmem:[#allocation3 + $0x3b8] sm:$0xff]
    %v169 = vld [vmem:[#allocation3 + $0x3c0] sm:$0xff]
    %v170 = vld [vmem:[#allocation3 + $0x3c8] sm:$0xff]
    %v171 = vld [vmem:[#allocation3 + $0x3d0] sm:$0xff]
    %v172 = vld [vmem:[#allocation3 + $0x3d8] sm:$0xff]
    %v173 = vld [vmem:[#allocation3 + $0x3e0] sm:$0xff]
    %v174 = vld [vmem:[#allocation3 + $0x3e8] sm:$0xff]
    %v175 = vld [vmem:[#allocation3 + $0x3f0] sm:$0xff]
    %v176 = vld [vmem:[#allocation3 + $0x3f8] sm:$0xff]
    %v177 = vld [vmem:[#allocation3 + $0x400] sm:$0xff]
    %v178 = vld [vmem:[#allocation3 + $0x408] sm:$0xff]
    %v179 = vld [vmem:[#allocation3 + $0x410] sm:$0xff]
    %v180 = vld [vmem:[#allocation3 + $0x418] sm:$0xff]
    %v181 = vld [vmem:[#allocation3 + $0x420] sm:$0xff]
    %v182 = vld [vmem:[#allocation3 + $0x428] sm:$0xff]
    %v183 = vld [vmem:[#allocation3 + $0x430] sm:$0xff]
    %v184 = vld [vmem:[#allocation3 + $0x438] sm:$0xff]
    %v185 = vld [vmem:[#allocation3 + $0x440] sm:$0xff]
    %v186 = vld [vmem:[#allocation3 + $0x448] sm:$0xff]
    %v187 = vld [vmem:[#allocation3 + $0x450] sm:$0xff]
    %v188 = vld [vmem:[#allocation3 + $0x458] sm:$0xff]
    %v189 = vld [vmem:[#allocation3 + $0x460] sm:$0xff]
    %v190 = vld [vmem:[#allocation3 + $0x468] sm:$0xff]
    %v191 = vld [vmem:[#allocation3 + $0x470] sm:$0xff]
    %v192 = vld [vmem:[#allocation3 + $0x478] sm:$0xff]
    %v193 = vld [vmem:[#allocation3 + $0x480] sm:$0xff]
    %v194 = vld [vmem:[#allocation3 + $0x488] sm:$0xff]
    %v195 = vld [vmem:[#allocation3 + $0x490] sm:$0xff]
    %v196 = vld [vmem:[#allocation3 + $0x498] sm:$0xff]
    %v197 = vld [vmem:[#allocation3 + $0x4a0] sm:$0xff]
    %v198 = vld [vmem:[#allocation3 + $0x4a8] sm:$0xff]
    %v199 = vld [vmem:[#allocation3 + $0x4b0] sm:$0xff]
    %v200 = vld [vmem:[#allocation3 + $0x4b8] sm:$0xff]
    %v201 = vld [vmem:[#allocation3 + $0x4c0] sm:$0xff]
    %v202 = vld [vmem:[#allocation3 + $0x4c8] sm:$0xff]
    %v203 = vld [vmem:[#allocation3 + $0x4d0] sm:$0xff]
    %v204 = vld [vmem:[#allocation3 + $0x4d8] sm:$0xff]
    %v205 = vld [vmem:[#allocation3 + $0x4e0] sm:$0xff]
    %v206 = vld [vmem:[#allocation3 + $0x4e8] sm:$0xff]
    %v207 = vld [vmem:[#allocation3 + $0x4f0] sm:$0xff]
    %v208 = vld [vmem:[#allocation3 + $0x4f8] sm:$0xff]
    %v209 = vld [vmem:[#allocation3 + $0x500] sm:$0xff]
    %v210 = vld [vmem:[#allocation3 + $0x508] sm:$0xff]
    %v211 = vld [vmem:[#allocation3 + $0x510] sm:$0xff]
    %v212 = vld [vmem:[#allocation3 + $0x518] sm:$0xff]
    %v213 = vld [vmem:[#allocation3 + $0x520] sm:$0xff]
    %v214 = vld [vmem:[#allocation3 + $0x528] sm:$0xff]
    %v215 = vld [vmem:[#allocation3 + $0x530] sm:$0xff]
    %v216 = vld [vmem:[#allocation3 + $0x538] sm:$0xff]
    %v217 = vld [vmem:[#allocation3 + $0x540] sm:$0xff]
    %v218 = vld [vmem:[#allocation3 + $0x548] sm:$0xff]
    %v219 = vld [vmem:[#allocation3 + $0x550] sm:$0xff]
    %v220 = vld [vmem:[#allocation3 + $0x558] sm:$0xff]
    %v221 = vld [vmem:[#allocation3 + $0x560] sm:$0xff]
    %v222 = vld [vmem:[#allocation3 + $0x568] sm:$0xff]
    %v223 = vld [vmem:[#allocation3 + $0x570] sm:$0xff]
    %v224 = vld [vmem:[#allocation3 + $0x578] sm:$0xff]
    %v225 = vld [vmem:[#allocation3 + $0x580] sm:$0xff]
    %v226 = vld [vmem:[#allocation3 + $0x588] sm:$0xff]
    %v227 = vld [vmem:[#allocation3 + $0x590] sm:$0xff]
    %v228 = vld [vmem:[#allocation3 + $0x598] sm:$0xff]
    %v229 = vld [vmem:[#allocation3 + $0x5a0] sm:$0xff]
    %v230 = vld [vmem:[#allocation3 + $0x5a8] sm:$0xff]
    %v231 = vld [vmem:[#allocation3 + $0x5b0] sm:$0xff]
    %v232 = vld [vmem:[#allocation3 + $0x5b8] sm:$0xff]
    %v233 = vld [vmem:[#allocation3 + $0x5c0] sm:$0xff]
    %v234 = vld [vmem:[#allocation3 + $0x5c8] sm:$0xff]
    %v235 = vld [vmem:[#allocation3 + $0x5d0] sm:$0xff]
    %v236 = vld [vmem:[#allocation3 + $0x5d8] sm:$0xff]
    %v237 = vld [vmem:[#allocation3 + $0x5e0] sm:$0xff]
    %v238 = vld [vmem:[#allocation3 + $0x5e8] sm:$0xff]
    %v239 = vld [vmem:[#allocation3 + $0x5f0] sm:$0xff]
    %v240 = vld [vmem:[#allocation3 + $0x5f8] sm:$0xff]
    %v241 = vld [vmem:[#allocation3 + $0x600] sm:$0xff]
    %v242 = vld [vmem:[#allocation3 + $0x608] sm:$0xff]
    %v243 = vld [vmem:[#allocation3 + $0x610] sm:$0xff]
    %v244 = vld [vmem:[#allocation3 + $0x618] sm:$0xff]
    %v245 = vld [vmem:[#allocation3 + $0x620] sm:$0xff]
    %v246 = vld [vmem:[#allocation3 + $0x628] sm:$0xff]
    %v247 = vld [vmem:[#allocation3 + $0x630] sm:$0xff]
    %v248 = vld [vmem:[#allocation3 + $0x638] sm:$0xff]
    %v249 = vld [vmem:[#allocation3 + $0x640] sm:$0xff]
    %v250 = vld [vmem:[#allocation3 + $0x648] sm:$0xff]
    %v251 = vld [vmem:[#allocation3 + $0x650] sm:$0xff]
    %v252 = vld [vmem:[#allocation3 + $0x658] sm:$0xff]
    %v253 = vld [vmem:[#allocation3 + $0x660] sm:$0xff]
    %v254 = vld [vmem:[#allocation3 + $0x668] sm:$0xff]
    %v255 = vld [vmem:[#allocation3 + $0x670] sm:$0xff]
    %v256 = vld [vmem:[#allocation3 + $0x678] sm:$0xff]
    %v257 = vld [vmem:[#allocation3 + $0x680] sm:$0xff]
    %v258 = vld [vmem:[#allocation3 + $0x688] sm:$0xff]
    %v259 = vld [vmem:[#allocation3 + $0x690] sm:$0xff]
    %v260 = vld [vmem:[#allocation3 + $0x698] sm:$0xff]
    %v261 = vld [vmem:[#allocation3 + $0x6a0] sm:$0xff]
    %v262 = vld [vmem:[#allocation3 + $0x6a8] sm:$0xff]
    %v263 = vld [vmem:[#allocation3 + $0x6b0] sm:$0xff]
    %v264 = vld [vmem:[#allocation3 + $0x6b8] sm:$0xff]
    %v265 = vld [vmem:[#allocation3 + $0x6c0] sm:$0xff]
    %v266 = vld [vmem:[#allocation3 + $0x6c8] sm:$0xff]
    %v267 = vld [vmem:[#allocation3 + $0x6d0] sm:$0xff]
    %v268 = vld [vmem:[#allocation3 + $0x6d8] sm:$0xff]
    %v269 = vld [vmem:[#allocation3 + $0x6e0] sm:$0xff]
    %v270 = vld [vmem:[#allocation3 + $0x6e8] sm:$0xff]
    %v271 = vld [vmem:[#allocation3 + $0x6f0] sm:$0xff]
    %v272 = vld [vmem:[#allocation3 + $0x6f8] sm:$0xff]
    %v273 = vld [vmem:[#allocation3 + $0x700] sm:$0xff]
    %v274 = vld [vmem:[#allocation3 + $0x708] sm:$0xff]
    %v275 = vld [vmem:[#allocation3 + $0x710] sm:$0xff]
    %v276 = vld [vmem:[#allocation3 + $0x718] sm:$0xff]
    %v277 = vld [vmem:[#allocation3 + $0x720] sm:$0xff]
    %v278 = vld [vmem:[#allocation3 + $0x728] sm:$0xff]
    %v279 = vld [vmem:[#allocation3 + $0x730] sm:$0xff]
    %v280 = vld [vmem:[#allocation3 + $0x738] sm:$0xff]
    %v281 = vld [vmem:[#allocation3 + $0x740] sm:$0xff]
    %v282 = vld [vmem:[#allocation3 + $0x748] sm:$0xff]
    %v283 = vld [vmem:[#allocation3 + $0x750] sm:$0xff]
    %v284 = vld [vmem:[#allocation3 + $0x758] sm:$0xff]
    %v285 = vld [vmem:[#allocation3 + $0x760] sm:$0xff]
    %v286 = vld [vmem:[#allocation3 + $0x768] sm:$0xff]
    %v287 = vld [vmem:[#allocation3 + $0x770] sm:$0xff]
    %v288 = vld [vmem:[#allocation3 + $0x778] sm:$0xff]
    %v289 = vld [vmem:[#allocation3 + $0x780] sm:$0xff]
    %v290 = vld [vmem:[#allocation3 + $0x788] sm:$0xff]
    %v291 = vld [vmem:[#allocation3 + $0x790] sm:$0xff]
    %v292 = vld [vmem:[#allocation3 + $0x798] sm:$0xff]
    %v293 = vld [vmem:[#allocation3 + $0x7a0] sm:$0xff]
    %v294 = vld [vmem:[#allocation3 + $0x7a8] sm:$0xff]
    %v295 = vld [vmem:[#allocation3 + $0x7b0] sm:$0xff]
    %v296 = vld [vmem:[#allocation3 + $0x7b8] sm:$0xff]
    %v297 = vld [vmem:[#allocation3 + $0x7c0] sm:$0xff]
    %v298 = vld [vmem:[#allocation3 + $0x7c8] sm:$0xff]
    %v299 = vld [vmem:[#allocation3 + $0x7d0] sm:$0xff]
    %v300 = vld [vmem:[#allocation3 + $0x7d8] sm:$0xff]
    %v301 = vld [vmem:[#allocation3 + $0x7e0] sm:$0xff]
    %v302 = vld [vmem:[#allocation3 + $0x7e8] sm:$0xff]
    %v303 = vld [vmem:[#allocation3 + $0x7f0] sm:$0xff]
    %v304 = vld [vmem:[#allocation3 + $0x7f8] sm:$0xff]
    %v305 = vld [vmem:[#allocation3 + $0x800] sm:$0xff]
    %v306 = vld [vmem:[#allocation3 + $0x808] sm:$0xff]
    %v307 = vld [vmem:[#allocation3 + $0x810] sm:$0xff]
    %v308 = vld [vmem:[#allocation3 + $0x818] sm:$0xff]
    %v309 = vld [vmem:[#allocation3 + $0x820] sm:$0xff]
    %v310 = vld [vmem:[#allocation3 + $0x828] sm:$0xff]
    %v311 = vld [vmem:[#allocation3 + $0x830] sm:$0xff]
    %v312 = vld [vmem:[#allocation3 + $0x838] sm:$0xff]
    %v313 = vld [vmem:[#allocation3 + $0x840] sm:$0xff]
    %v314 = vld [vmem:[#allocation3 + $0x848] sm:$0xff]
    %v315 = vld [vmem:[#allocation3 + $0x850] sm:$0xff]
    %v316 = vld [vmem:[#allocation3 + $0x858] sm:$0xff]
    %v317 = vld [vmem:[#allocation3 + $0x860] sm:$0xff]
    %v318 = vld [vmem:[#allocation3 + $0x868] sm:$0xff]
    %v319 = vld [vmem:[#allocation3 + $0x870] sm:$0xff]
    %v320 = vld [vmem:[#allocation3 + $0x878] sm:$0xff]
    %v321 = vld [vmem:[#allocation3 + $0x880] sm:$0xff]
    %v322 = vld [vmem:[#allocation3 + $0x888] sm:$0xff]
    %v323 = vld [vmem:[#allocation3 + $0x890] sm:$0xff]
    %v324 = vld [vmem:[#allocation3 + $0x898] sm:$0xff]
    %v325 = vld [vmem:[#allocation3 + $0x8a0] sm:$0xff]
    %v326 = vld [vmem:[#allocation3 + $0x8a8] sm:$0xff]
    %v327 = vld [vmem:[#allocation3 + $0x8b0] sm:$0xff]
    %v328 = vld [vmem:[#allocation3 + $0x8b8] sm:$0xff]
    %v329 = vld [vmem:[#allocation3 + $0x8c0] sm:$0xff]
    %v330 = vld [vmem:[#allocation3 + $0x8c8] sm:$0xff]
    %v331 = vld [vmem:[#allocation3 + $0x8d0] sm:$0xff]
    %v332 = vld [vmem:[#allocation3 + $0x8d8] sm:$0xff]
    %v333 = vld [vmem:[#allocation3 + $0x8e0] sm:$0xff]
    %v334 = vld [vmem:[#allocation3 + $0x8e8] sm:$0xff]
    %v335 = vld [vmem:[#allocation3 + $0x8f0] sm:$0xff]
    %v336 = vld [vmem:[#allocation3 + $0x8f8] sm:$0xff]
    %v337 = vld [vmem:[#allocation3 + $0x900] sm:$0xff]
    %v338 = vld [vmem:[#allocation3 + $0x908] sm:$0xff]
    %v339 = vld [vmem:[#allocation3 + $0x910] sm:$0xff]
    %v340 = vld [vmem:[#allocation3 + $0x918] sm:$0xff]
    %v341 = vld [vmem:[#allocation3 + $0x920] sm:$0xff]
    %v342 = vld [vmem:[#allocation3 + $0x928] sm:$0xff]
    %v343 = vld [vmem:[#allocation3 + $0x930] sm:$0xff]
    %v344 = vld [vmem:[#allocation3 + $0x938] sm:$0xff]
    %v345 = vld [vmem:[#allocation3 + $0x940] sm:$0xff]
    %v346 = vld [vmem:[#allocation3 + $0x948] sm:$0xff]
    %v347 = vld [vmem:[#allocation3 + $0x950] sm:$0xff]
    %v348 = vld [vmem:[#allocation3 + $0x958] sm:$0xff]
    %v349 = vld [vmem:[#allocation3 + $0x960] sm:$0xff]
    %v350 = vld [vmem:[#allocation3 + $0x968] sm:$0xff]
    %v351 = vld [vmem:[#allocation3 + $0x970] sm:$0xff]
    %v352 = vld [vmem:[#allocation3 + $0x978] sm:$0xff]
    %v353 = vld [vmem:[#allocation3 + $0x980] sm:$0xff]
    %v354 = vld [vmem:[#allocation3 + $0x988] sm:$0xff]
    %v355 = vld [vmem:[#allocation3 + $0x990] sm:$0xff]
    %v356 = vld [vmem:[#allocation3 + $0x998] sm:$0xff]
    %v357 = vld [vmem:[#allocation3 + $0x9a0] sm:$0xff]
    %v358 = vld [vmem:[#allocation3 + $0x9a8] sm:$0xff]
    %v359 = vld [vmem:[#allocation3 + $0x9b0] sm:$0xff]
    %v360 = vld [vmem:[#allocation3 + $0x9b8] sm:$0xff]
    %v361 = vld [vmem:[#allocation3 + $0x9c0] sm:$0xff]
    %v362 = vld [vmem:[#allocation3 + $0x9c8] sm:$0xff]
    %v363 = vld [vmem:[#allocation3 + $0x9d0] sm:$0xff]
    %v364 = vld [vmem:[#allocation3 + $0x9d8] sm:$0xff]
    %v365 = vld [vmem:[#allocation3 + $0x9e0] sm:$0xff]
    %v366 = vld [vmem:[#allocation3 + $0x9e8] sm:$0xff]
    %v367 = vld [vmem:[#allocation3 + $0x9f0] sm:$0xff]
    %v368 = vld [vmem:[#allocation3 + $0x9f8] sm:$0xff]
    %v369 = vld [vmem:[#allocation3 + $0xa00] sm:$0xff]
    %v370 = vld [vmem:[#allocation3 + $0xa08] sm:$0xff]
    %v371 = vld [vmem:[#allocation3 + $0xa10] sm:$0xff]
    %v372 = vld [vmem:[#allocation3 + $0xa18] sm:$0xff]
    %v373 = vld [vmem:[#allocation3 + $0xa20] sm:$0xff]
    %v374 = vld [vmem:[#allocation3 + $0xa28] sm:$0xff]
    %v375 = vld [vmem:[#allocation3 + $0xa30] sm:$0xff]
    %v376 = vld [vmem:[#allocation3 + $0xa38] sm:$0xff]
    %v377 = vld [vmem:[#allocation3 + $0xa40] sm:$0xff]
    %v378 = vld [vmem:[#allocation3 + $0xa48] sm:$0xff]
    %v379 = vld [vmem:[#allocation3 + $0xa50] sm:$0xff]
    %v380 = vld [vmem:[#allocation3 + $0xa58] sm:$0xff]
    %v381 = vld [vmem:[#allocation3 + $0xa60] sm:$0xff]
    %v382 = vld [vmem:[#allocation3 + $0xa68] sm:$0xff]
    %v383 = vld [vmem:[#allocation3 + $0xa70] sm:$0xff]
    %v384 = vld [vmem:[#allocation3 + $0xa78] sm:$0xff]
    %v385 = vpack.c.bf16 %v56, %v49
    %v386 = vpack.c.bf16 %v57, %v50
    %v387 = vpack.c.bf16 %v58, %v51
    %v388 = vpack.c.bf16 %v59, %v52
    %v389 = vpack.c.bf16 %v60, %v53
    %v390 = vpack.c.bf16 %v61, %v54
    %v391 = vpack.c.bf16 %v62, %v55
    %v392 = vpack.c.bf16 %v70, %v63
    %v393 = vpack.c.bf16 %v71, %v64
    %v394 = vpack.c.bf16 %v72, %v65
    %v395 = vpack.c.bf16 %v73, %v66
    %v396 = vpack.c.bf16 %v74, %v67
    %v397 = vpack.c.bf16 %v75, %v68
    %v398 = vpack.c.bf16 %v76, %v69
    %v399 = vpack.c.bf16 %v84, %v77
    %v400 = vpack.c.bf16 %v85, %v78
    %v401 = vpack.c.bf16 %v86, %v79
    %v402 = vpack.c.bf16 %v87, %v80
    %v403 = vpack.c.bf16 %v88, %v81
    %v404 = vpack.c.bf16 %v89, %v82
    %v405 = vpack.c.bf16 %v90, %v83
    %v406 = vpack.c.bf16 %v98, %v91
    %v407 = vpack.c.bf16 %v99, %v92
    %v408 = vpack.c.bf16 %v100, %v93
    %v409 = vpack.c.bf16 %v101, %v94
    %v410 = vpack.c.bf16 %v102, %v95
    %v411 = vpack.c.bf16 %v103, %v96
    %v412 = vpack.c.bf16 %v104, %v97
    %v413 = vpack.c.bf16 %v112, %v105
    %v414 = vpack.c.bf16 %v113, %v106
    %v415 = vpack.c.bf16 %v114, %v107
    %v416 = vpack.c.bf16 %v115, %v108
    %v417 = vpack.c.bf16 %v116, %v109
    %v418 = vpack.c.bf16 %v117, %v110
    %v419 = vpack.c.bf16 %v118, %v111
    %v420 = vpack.c.bf16 %v126, %v119
    %v421 = vpack.c.bf16 %v127, %v120
    %v422 = vpack.c.bf16 %v128, %v121
    %v423 = vpack.c.bf16 %v129, %v122
    %v424 = vpack.c.bf16 %v130, %v123
    %v425 = vpack.c.bf16 %v131, %v124
    %v426 = vpack.c.bf16 %v132, %v125
    %v427 = vpack.c.bf16 %v140, %v133
    %v428 = vpack.c.bf16 %v141, %v134
    %v429 = vpack.c.bf16 %v142, %v135
    %v430 = vpack.c.bf16 %v143, %v136
    %v431 = vpack.c.bf16 %v144, %v137
    %v432 = vpack.c.bf16 %v145, %v138
    %v433 = vpack.c.bf16 %v146, %v139
    %v434 = vpack.c.bf16 %v154, %v147
    %v435 = vpack.c.bf16 %v155, %v148
    %v436 = vpack.c.bf16 %v156, %v149
    %v437 = vpack.c.bf16 %v157, %v150
    %v438 = vpack.c.bf16 %v158, %v151
    %v439 = vpack.c.bf16 %v159, %v152
    %v440 = vpack.c.bf16 %v160, %v153
    %v441 = vpack.c.bf16 %v168, %v161
    %v442 = vpack.c.bf16 %v169, %v162
    %v443 = vpack.c.bf16 %v170, %v163
    %v444 = vpack.c.bf16 %v171, %v164
    %v445 = vpack.c.bf16 %v172, %v165
    %v446 = vpack.c.bf16 %v173, %v166
    %v447 = vpack.c.bf16 %v174, %v167
    %v448 = vpack.c.bf16 %v182, %v175
    %v449 = vpack.c.bf16 %v183, %v176
    %v450 = vpack.c.bf16 %v184, %v177
    %v451 = vpack.c.bf16 %v185, %v178
    %v452 = vpack.c.bf16 %v186, %v179
    %v453 = vpack.c.bf16 %v187, %v180
    %v454 = vpack.c.bf16 %v188, %v181
    %v455 = vpack.c.bf16 %v196, %v189
    %v456 = vpack.c.bf16 %v197, %v190
    %v457 = vpack.c.bf16 %v198, %v191
    %v458 = vpack.c.bf16 %v199, %v192
    %v459 = vpack.c.bf16 %v200, %v193
    %v460 = vpack.c.bf16 %v201, %v194
    %v461 = vpack.c.bf16 %v202, %v195
    %v462 = vpack.c.bf16 %v210, %v203
    %v463 = vpack.c.bf16 %v211, %v204
    %v464 = vpack.c.bf16 %v212, %v205
    %v465 = vpack.c.bf16 %v213, %v206
    %v466 = vpack.c.bf16 %v214, %v207
    %v467 = vpack.c.bf16 %v215, %v208
    %v468 = vpack.c.bf16 %v216, %v209
    %v469 = vpack.c.bf16 %v224, %v217
    %v470 = vpack.c.bf16 %v225, %v218
    %v471 = vpack.c.bf16 %v226, %v219
    %v472 = vpack.c.bf16 %v227, %v220
    %v473 = vpack.c.bf16 %v228, %v221
    %v474 = vpack.c.bf16 %v229, %v222
    %v475 = vpack.c.bf16 %v230, %v223
    %v476 = vpack.c.bf16 %v238, %v231
    %v477 = vpack.c.bf16 %v239, %v232
    %v478 = vpack.c.bf16 %v240, %v233
    %v479 = vpack.c.bf16 %v241, %v234
    %v480 = vpack.c.bf16 %v242, %v235
    %v481 = vpack.c.bf16 %v243, %v236
    %v482 = vpack.c.bf16 %v244, %v237
    %v483 = vpack.c.bf16 %v252, %v245
    %v484 = vpack.c.bf16 %v253, %v246
    %v485 = vpack.c.bf16 %v254, %v247
    %v486 = vpack.c.bf16 %v255, %v248
    %v487 = vpack.c.bf16 %v256, %v249
    %v488 = vpack.c.bf16 %v257, %v250
    %v489 = vpack.c.bf16 %v258, %v251
    %v490 = vpack.c.bf16 %v266, %v259
    %v491 = vpack.c.bf16 %v267, %v260
    %v492 = vpack.c.bf16 %v268, %v261
    %v493 = vpack.c.bf16 %v269, %v262
    %v494 = vpack.c.bf16 %v270, %v263
    %v495 = vpack.c.bf16 %v271, %v264
    %v496 = vpack.c.bf16 %v272, %v265
    %v497 = vpack.c.bf16 %v280, %v273
    %v498 = vpack.c.bf16 %v281, %v274
    %v499 = vpack.c.bf16 %v282, %v275
    %v500 = vpack.c.bf16 %v283, %v276
    %v501 = vpack.c.bf16 %v284, %v277
    %v502 = vpack.c.bf16 %v285, %v278
    %v503 = vpack.c.bf16 %v286, %v279
    %v504 = vpack.c.bf16 %v294, %v287
    %v505 = vpack.c.bf16 %v295, %v288
    %v506 = vpack.c.bf16 %v296, %v289
    %v507 = vpack.c.bf16 %v297, %v290
    %v508 = vpack.c.bf16 %v298, %v291
    %v509 = vpack.c.bf16 %v299, %v292
    %v510 = vpack.c.bf16 %v300, %v293
    %v511 = vpack.c.bf16 %v308, %v301
    %v512 = vpack.c.bf16 %v309, %v302
    %v513 = vpack.c.bf16 %v310, %v303
    %v514 = vpack.c.bf16 %v311, %v304
    %v515 = vpack.c.bf16 %v312, %v305
    %v516 = vpack.c.bf16 %v313, %v306
    %v517 = vpack.c.bf16 %v314, %v307
    %v518 = vpack.c.bf16 %v322, %v315
    %v519 = vpack.c.bf16 %v323, %v316
    %v520 = vpack.c.bf16 %v324, %v317
    %v521 = vpack.c.bf16 %v325, %v318
    %v522 = vpack.c.bf16 %v326, %v319
    %v523 = vpack.c.bf16 %v327, %v320
    %v524 = vpack.c.bf16 %v328, %v321
    %v525 = vpack.c.bf16 %v336, %v329
    %v526 = vpack.c.bf16 %v337, %v330
    %v527 = vpack.c.bf16 %v338, %v331
    %v528 = vpack.c.bf16 %v339, %v332
    %v529 = vpack.c.bf16 %v340, %v333
    %v530 = vpack.c.bf16 %v341, %v334
    %v531 = vpack.c.bf16 %v342, %v335
    %v532 = vpack.c.bf16 %v350, %v343
    %v533 = vpack.c.bf16 %v351, %v344
    %v534 = vpack.c.bf16 %v352, %v345
    %v535 = vpack.c.bf16 %v353, %v346
    %v536 = vpack.c.bf16 %v354, %v347
    %v537 = vpack.c.bf16 %v355, %v348
    %v538 = vpack.c.bf16 %v356, %v349
    %v539 = vpack.c.bf16 %v364, %v357
    %v540 = vpack.c.bf16 %v365, %v358
    %v541 = vpack.c.bf16 %v366, %v359
    %v542 = vpack.c.bf16 %v367, %v360
    %v543 = vpack.c.bf16 %v368, %v361
    %v544 = vpack.c.bf16 %v369, %v362
    %v545 = vpack.c.bf16 %v370, %v363
    %v546 = vpack.c.bf16 %v378, %v371
    %v547 = vpack.c.bf16 %v379, %v372
    %v548 = vpack.c.bf16 %v380, %v373
    %v549 = vpack.c.bf16 %v381, %v374
    %v550 = vpack.c.bf16 %v382, %v375
    %v551 = vpack.c.bf16 %v383, %v376
    %v552 = vpack.c.bf16 %v384, %v377
    %v553 = vld [vmem:[%s1] sm:$0xf]
    %v554 = vld [vmem:[%s1 + $0x4] sm:$0xf]
    %v555 = vld [vmem:[%s1 + $0x8] sm:$0xf]
    %v556 = vld [vmem:[%s1 + $0xc] sm:$0xf]
    %v557 = vld [vmem:[%s1 + $0x10] sm:$0xf]
    %v558 = vld [vmem:[%s1 + $0x14] sm:$0xf]
    %v559 = vld [vmem:[%s1 + $0x18] sm:$0xf]
    %v560 = vld [vmem:[%s1 + $0x1c] sm:$0xf]
    %v561 = vld [vmem:[%s1 + $0x20] sm:$0xf]
    %v562 = vld [vmem:[%s1 + $0x24] sm:$0xf]
    %v563 = vld [vmem:[%s1 + $0x28] sm:$0xf]
    %v564 = vld [vmem:[%s1 + $0x2c] sm:$0xf]
    %v565 = vld [vmem:[%s1 + $0x30] sm:$0xf]
    %v566 = vld [vmem:[%s1 + $0x34] sm:$0xf]
    %v567 = vld [vmem:[%s1 + $0x38] sm:$0xf]
    %v568 = vld [vmem:[%s1 + $0x3c] sm:$0xf]
    %v569 = vld [vmem:[%s1 + $0x40] sm:$0xf]
    %v570 = vld [vmem:[%s1 + $0x44] sm:$0xf]
    %v571 = vld [vmem:[%s1 + $0x48] sm:$0xf]
    %v572 = vld [vmem:[%s1 + $0x4c] sm:$0xf]
    %v573 = vld [vmem:[%s1 + $0x50] sm:$0xf]
    %v574 = vld [vmem:[%s1 + $0x54] sm:$0xf]
    %v575 = vld [vmem:[%s1 + $0x58] sm:$0xf]
    %v576 = vld [vmem:[%s1 + $0x5c] sm:$0xf]
    %v577 = vld [vmem:[%s1 + $0x60] sm:$0xf]
    %v578 = vld [vmem:[%s1 + $0x64] sm:$0xf]
    %v579 = vld [vmem:[%s1 + $0x68] sm:$0xf]
    %v580 = vld [vmem:[%s1 + $0x6c] sm:$0xf]
    %v581 = vld [vmem:[%s1 + $0x70] sm:$0xf]
    %v582 = vld [vmem:[%s1 + $0x74] sm:$0xf]
    %v583 = vld [vmem:[%s1 + $0x78] sm:$0xf]
    %v584 = vld [vmem:[%s1 + $0x7c] sm:$0xf]
    %v585 = vld [vmem:[%s1 + $0x80] sm:$0xf]
    %v586 = vld [vmem:[%s1 + $0x84] sm:$0xf]
    %v587 = vld [vmem:[%s1 + $0x88] sm:$0xf]
    %v588 = vld [vmem:[%s1 + $0x8c] sm:$0xf]
    %v589 = vld [vmem:[%s1 + $0x90] sm:$0xf]
    %v590 = vld [vmem:[%s1 + $0x94] sm:$0xf]
    %v591 = vld [vmem:[%s1 + $0x98] sm:$0xf]
    %v592 = vld [vmem:[%s1 + $0x9c] sm:$0xf]
    %v593 = vld [vmem:[%s1 + $0xa0] sm:$0xf]
    %v594 = vld [vmem:[%s1 + $0xa4] sm:$0xf]
    %v595 = vld [vmem:[%s1 + $0xa8] sm:$0xf]
    %v596 = vld [vmem:[%s1 + $0xac] sm:$0xf]
    %v597 = vld [vmem:[%s1 + $0xb0] sm:$0xf]
    %v598 = vld [vmem:[%s1 + $0xb4] sm:$0xf]
    %v599 = vld [vmem:[%s1 + $0xb8] sm:$0xf]
    %v600 = vld [vmem:[%s1 + $0xbc] sm:$0xf]
    %v601 = vld [vmem:[%s1 + $0xc0] sm:$0xf]
    %v602 = vld [vmem:[%s1 + $0xc4] sm:$0xf]
    %v603 = vld [vmem:[%s1 + $0xc8] sm:$0xf]
    %v604 = vld [vmem:[%s1 + $0xcc] sm:$0xf]
    %v605 = vld [vmem:[%s1 + $0xd0] sm:$0xf]
    %v606 = vld [vmem:[%s1 + $0xd4] sm:$0xf]
    %v607 = vld [vmem:[%s1 + $0xd8] sm:$0xf]
    %v608 = vld [vmem:[%s1 + $0xdc] sm:$0xf]
    %v609 = vld [vmem:[%s1 + $0xe0] sm:$0xf]
    %v610 = vld [vmem:[%s1 + $0xe4] sm:$0xf]
    %v611 = vld [vmem:[%s1 + $0xe8] sm:$0xf]
    %v612 = vld [vmem:[%s1 + $0xec] sm:$0xf]
    %v613 = vld [vmem:[%s1 + $0xf0] sm:$0xf]
    %v614 = vld [vmem:[%s1 + $0xf4] sm:$0xf]
    %v615 = vld [vmem:[%s1 + $0xf8] sm:$0xf]
    %v616 = vld [vmem:[%s1 + $0xfc] sm:$0xf]
    %v617 = vld [vmem:[%s1 + $0x100] sm:$0xf]
    %v618 = vld [vmem:[%s1 + $0x104] sm:$0xf]
    %v619 = vld [vmem:[%s1 + $0x108] sm:$0xf]
    %v620 = vld [vmem:[%s1 + $0x10c] sm:$0xf]
    %v621 = vld [vmem:[%s1 + $0x110] sm:$0xf]
    %v622 = vld [vmem:[%s1 + $0x114] sm:$0xf]
    %v623 = vld [vmem:[%s1 + $0x118] sm:$0xf]
    %v624 = vld [vmem:[%s1 + $0x11c] sm:$0xf]
    %v625 = vld [vmem:[%s1 + $0x120] sm:$0xf]
    %v626 = vld [vmem:[%s1 + $0x124] sm:$0xf]
    %v627 = vld [vmem:[%s1 + $0x128] sm:$0xf]
    %v628 = vld [vmem:[%s1 + $0x12c] sm:$0xf]
    %v629 = vld [vmem:[%s1 + $0x130] sm:$0xf]
    %v630 = vld [vmem:[%s1 + $0x134] sm:$0xf]
    %v631 = vld [vmem:[%s1 + $0x138] sm:$0xf]
    %v632 = vld [vmem:[%s1 + $0x13c] sm:$0xf]
    %v633 = vld [vmem:[%s1 + $0x140] sm:$0xf]
    %v634 = vld [vmem:[%s1 + $0x144] sm:$0xf]
    %v635 = vld [vmem:[%s1 + $0x148] sm:$0xf]
    %v636 = vld [vmem:[%s1 + $0x14c] sm:$0xf]
    %v637 = vld [vmem:[%s1 + $0x150] sm:$0xf]
    %v638 = vld [vmem:[%s1 + $0x154] sm:$0xf]
    %v639 = vld [vmem:[%s1 + $0x158] sm:$0xf]
    %v640 = vld [vmem:[%s1 + $0x15c] sm:$0xf]
    %v641 = vld [vmem:[%s1 + $0x160] sm:$0xf]
    %v642 = vld [vmem:[%s1 + $0x164] sm:$0xf]
    %v643 = vld [vmem:[%s1 + $0x168] sm:$0xf]
    %v644 = vld [vmem:[%s1 + $0x16c] sm:$0xf]
    %v645 = vld [vmem:[%s1 + $0x170] sm:$0xf]
    %v646 = vld [vmem:[%s1 + $0x174] sm:$0xf]
    %v647 = vld [vmem:[%s1 + $0x178] sm:$0xf]
    %v648 = vld [vmem:[%s1 + $0x17c] sm:$0xf]
    %v649 = vld [vmem:[%s1 + $0x180] sm:$0xf]
    %v650 = vld [vmem:[%s1 + $0x184] sm:$0xf]
    %v651 = vld [vmem:[#allocation6] sm:$0x1]
    %v653 = vlaneseq
    %v654 = vshrl.u32 %v653, 7
    %v655 = vsub.s32 0, %v654
    %v656 = vrot.slane %v651, %v655
    %v756 = vunpack.c.l.b16 %v553
    %v757 = vunpack.c.l.b16 %v554
    %v758 = vunpack.c.l.b16 %v555
    %v759 = vunpack.c.l.b16 %v556
    %v760 = vunpack.c.l.b16 %v557
    %v761 = vunpack.c.l.b16 %v558
    %v762 = vunpack.c.l.b16 %v559
    %v763 = vunpack.c.l.b16 %v560
    %v764 = vunpack.c.l.b16 %v561
    %v765 = vunpack.c.l.b16 %v562
    %v766 = vunpack.c.l.b16 %v563
    %v767 = vunpack.c.l.b16 %v564
    %v768 = vunpack.c.l.b16 %v565
    %v769 = vunpack.c.l.b16 %v566
    %v770 = vunpack.c.l.b16 %v567
    %v771 = vunpack.c.l.b16 %v568
    %v772 = vunpack.c.l.b16 %v569
    %v773 = vunpack.c.l.b16 %v570
    %v774 = vunpack.c.l.b16 %v571
    %v775 = vunpack.c.l.b16 %v572
    %v776 = vunpack.c.l.b16 %v573
    %v777 = vunpack.c.l.b16 %v574
    %v778 = vunpack.c.l.b16 %v575
    %v779 = vunpack.c.l.b16 %v576
    %v780 = vunpack.c.l.b16 %v577
    %v781 = vunpack.c.l.b16 %v578
    %v782 = vunpack.c.l.b16 %v579
    %v783 = vunpack.c.l.b16 %v580
    %v784 = vunpack.c.l.b16 %v581
    %v785 = vunpack.c.l.b16 %v582
    %v786 = vunpack.c.l.b16 %v583
    %v787 = vunpack.c.l.b16 %v584
    %v788 = vunpack.c.l.b16 %v585
    %v789 = vunpack.c.l.b16 %v586
    %v790 = vunpack.c.l.b16 %v587
    %v791 = vunpack.c.l.b16 %v588
    %v792 = vunpack.c.l.b16 %v589
    %v793 = vunpack.c.l.b16 %v590
    %v794 = vunpack.c.l.b16 %v591
    %v795 = vunpack.c.l.b16 %v592
    %v796 = vunpack.c.l.b16 %v593
    %v797 = vunpack.c.l.b16 %v594
    %v798 = vunpack.c.l.b16 %v595
    %v799 = vunpack.c.l.b16 %v596
    %v800 = vunpack.c.l.b16 %v597
    %v801 = vunpack.c.l.b16 %v598
    %v802 = vunpack.c.l.b16 %v599
    %v803 = vunpack.c.l.b16 %v600
    %v804 = vunpack.c.l.b16 %v601
    %v805 = vunpack.c.l.b16 %v602
    %v806 = vunpack.c.l.b16 %v603
    %v807 = vunpack.c.l.b16 %v604
    %v808 = vunpack.c.l.b16 %v605
    %v809 = vunpack.c.l.b16 %v606
    %v810 = vunpack.c.l.b16 %v607
    %v811 = vunpack.c.l.b16 %v608
    %v812 = vunpack.c.l.b16 %v609
    %v813 = vunpack.c.l.b16 %v610
    %v814 = vunpack.c.l.b16 %v611
    %v815 = vunpack.c.l.b16 %v612
    %v816 = vunpack.c.l.b16 %v613
    %v817 = vunpack.c.l.b16 %v614
    %v818 = vunpack.c.l.b16 %v615
    %v819 = vunpack.c.l.b16 %v616
    %v820 = vunpack.c.l.b16 %v617
    %v821 = vunpack.c.l.b16 %v618
    %v822 = vunpack.c.l.b16 %v619
    %v823 = vunpack.c.l.b16 %v620
    %v824 = vunpack.c.l.b16 %v621
    %v825 = vunpack.c.l.b16 %v622
    %v826 = vunpack.c.l.b16 %v623
    %v827 = vunpack.c.l.b16 %v624
    %v828 = vunpack.c.l.b16 %v625
    %v829 = vunpack.c.l.b16 %v626
    %v830 = vunpack.c.l.b16 %v627
    %v831 = vunpack.c.l.b16 %v628
    %v832 = vunpack.c.l.b16 %v629
    %v833 = vunpack.c.l.b16 %v630
    %v834 = vunpack.c.l.b16 %v631
    %v835 = vunpack.c.l.b16 %v632
    %v836 = vunpack.c.l.b16 %v633
    %v837 = vunpack.c.l.b16 %v634
    %v838 = vunpack.c.l.b16 %v635
    %v839 = vunpack.c.l.b16 %v636
    %v840 = vunpack.c.l.b16 %v637
    %v841 = vunpack.c.l.b16 %v638
    %v842 = vunpack.c.l.b16 %v639
    %v843 = vunpack.c.l.b16 %v640
    %v844 = vunpack.c.l.b16 %v641
    %v845 = vunpack.c.l.b16 %v642
    %v846 = vunpack.c.l.b16 %v643
    %v847 = vunpack.c.l.b16 %v644
    %v848 = vunpack.c.l.b16 %v645
    %v849 = vunpack.c.l.b16 %v646
    %v850 = vunpack.c.l.b16 %v647
    %v851 = vunpack.c.l.b16 %v648
    %v852 = vunpack.c.l.b16 %v649
    %v853 = vunpack.c.l.b16 %v650
    %v854 = vpack.c.b16 %v757, %v756
    %v855 = vpack.c.b16 %v759, %v758
    %v856 = vpack.c.b16 %v761, %v760
    %v857 = vpack.c.b16 %v763, %v762
    %v858 = vpack.c.b16 %v765, %v764
    %v859 = vpack.c.b16 %v767, %v766
    %v860 = vpack.c.b16 %v769, %v768
    %v861 = vpack.c.b16 %v771, %v770
    %v862 = vpack.c.b16 %v773, %v772
    %v863 = vpack.c.b16 %v775, %v774
    %v864 = vpack.c.b16 %v777, %v776
    %v865 = vpack.c.b16 %v779, %v778
    %v866 = vpack.c.b16 %v781, %v780
    %v867 = vpack.c.b16 %v783, %v782
    %v868 = vpack.c.b16 %v785, %v784
    %v869 = vpack.c.b16 %v787, %v786
    %v870 = vpack.c.b16 %v789, %v788
    %v871 = vpack.c.b16 %v791, %v790
    %v872 = vpack.c.b16 %v793, %v792
    %v873 = vpack.c.b16 %v795, %v794
    %v874 = vpack.c.b16 %v797, %v796
    %v875 = vpack.c.b16 %v799, %v798
    %v876 = vpack.c.b16 %v801, %v800
    %v877 = vpack.c.b16 %v803, %v802
    %v878 = vpack.c.b16 %v805, %v804
    %v879 = vpack.c.b16 %v807, %v806
    %v880 = vpack.c.b16 %v809, %v808
    %v881 = vpack.c.b16 %v811, %v810
    %v882 = vpack.c.b16 %v813, %v812
    %v883 = vpack.c.b16 %v815, %v814
    %v884 = vpack.c.b16 %v817, %v816
    %v885 = vpack.c.b16 %v819, %v818
    %v886 = vpack.c.b16 %v821, %v820
    %v887 = vpack.c.b16 %v823, %v822
    %v888 = vpack.c.b16 %v825, %v824
    %v889 = vpack.c.b16 %v827, %v826
    %v890 = vpack.c.b16 %v829, %v828
    %v891 = vpack.c.b16 %v831, %v830
    %v892 = vpack.c.b16 %v833, %v832
    %v893 = vpack.c.b16 %v835, %v834
    %v894 = vpack.c.b16 %v837, %v836
    %v895 = vpack.c.b16 %v839, %v838
    %v896 = vpack.c.b16 %v841, %v840
    %v897 = vpack.c.b16 %v843, %v842
    %v898 = vpack.c.b16 %v845, %v844
    %v899 = vpack.c.b16 %v847, %v846
    %v900 = vpack.c.b16 %v849, %v848
    %v901 = vpack.c.b16 %v851, %v850
    %v902 = vpack.c.b16 %v853, %v852
    %vm952 = vcmask 130048
    %v954 = vsel %vm952, %v391, 0
    %v957 = vsel %vm952, %v398, 0
    %v960 = vsel %vm952, %v405, 0
    %v963 = vsel %vm952, %v412, 0
    %v966 = vsel %vm952, %v419, 0
    %v969 = vsel %vm952, %v426, 0
    %v972 = vsel %vm952, %v433, 0
    %v975 = vsel %vm952, %v440, 0
    %v978 = vsel %vm952, %v447, 0
    %v981 = vsel %vm952, %v454, 0
    %v984 = vsel %vm952, %v461, 0
    %v987 = vsel %vm952, %v468, 0
    %v990 = vsel %vm952, %v475, 0
    %v993 = vsel %vm952, %v482, 0
    %v996 = vsel %vm952, %v489, 0
    %v999 = vsel %vm952, %v496, 0
    %v1002 = vsel %vm952, %v503, 0
    %v1005 = vsel %vm952, %v510, 0
    %v1008 = vsel %vm952, %v517, 0
    %v1011 = vsel %vm952, %v524, 0
    %v1014 = vsel %vm952, %v531, 0
    %v1017 = vsel %vm952, %v538, 0
    %v1020 = vsel %vm952, %v545, 0
    %v1023 = vsel %vm952, %v552, 0
    %1025 = vmatprep.subr.bf16.mxu0 0
    %1026 = vmatpush1.bf16.msra.mxu0 %v854
    %1027 = vmatprep.subr.bf16.mxu0 0
    %1028 = vmatpush1.bf16.msra.mxu0 %v855
    %1029 = vmatprep.subr.bf16.mxu0 0
    %1030 = vmatpush1.bf16.msra.mxu0 %v856
    %1031 = vmatprep.subr.bf16.mxu0 0
    %1032 = vmatpush1.bf16.msra.mxu0 %v857
    %1033 = vmatprep.subr.bf16.mxu0 0
    %1034 = vmatpush1.bf16.msra.mxu0 %v858
    %1035 = vmatprep.subr.bf16.mxu0 0
    %1036 = vmatpush1.bf16.msra.mxu0 %v859
    %1037 = vmatprep.subr.bf16.mxu0 0
    %1038 = vmatpush1.bf16.msra.mxu0 %v860
    %1039 = vmatprep.subr.bf16.mxu0 0
    %1040 = vmatpush1.bf16.msra.mxu0 %v861
    %1041 = vmatprep.subr.bf16.mxu0 0
    %1042 = vmatpush1.bf16.msra.mxu0 %v862
    %1043 = vmatprep.subr.bf16.mxu0 0
    %1044 = vmatpush1.bf16.msra.mxu0 %v863
    %1045 = vmatprep.subr.bf16.mxu0 0
    %1046 = vmatpush1.bf16.msra.mxu0 %v864
    %1047 = vmatprep.subr.bf16.mxu0 0
    %1048 = vmatpush1.bf16.msra.mxu0 %v865
    %1049 = vmatprep.subr.bf16.mxu0 0
    %1050 = vmatpush1.bf16.msra.mxu0 %v866
    %1051 = vmatprep.subr.bf16.mxu0 0
    %1052 = vmatpush1.bf16.msra.mxu0 %v867
    %1053 = vmatprep.subr.bf16.mxu0 0
    %1054 = vmatpush1.bf16.msra.mxu0 %v868
    %1055 = vmatprep.subr.bf16.mxu0 0
    %1056 = vmatpush1.bf16.msra.mxu0 %v869
    %1057 = vmatprep.mubr.bf16.mxu0 %v386
    %1058 = vmatmul.mubr.bf16.gmra.mrb[0].mxu0 %v385
    %v1059 = vpop.f32.mrb[0].mxu0
    %v1060 = vadd.f32 %v656, %v1059
    %v1061 = vpop.f32.mrb[0].mxu0
    %v1062 = vpop.f32.mrb[0].mxu0
    %v1063 = vadd.f32 %v656, %v1062
    %v1064 = vpop.f32.mrb[0].mxu0
    %1065 = vmatprep.mubr.bf16.mxu0 %v393
    %1066 = vmatmul.mubr.bf16.gmra.mrb[0].mxu0 %v392
    %v1067 = vpop.f32.mrb[0].mxu0
    %v1068 = vadd.f32 %v656, %v1067
    %v1069 = vpop.f32.mrb[0].mxu0
    %v1070 = vpop.f32.mrb[0].mxu0
    %v1071 = vadd.f32 %v656, %v1070
    %v1072 = vpop.f32.mrb[0].mxu0
    %1073 = vmatprep.mubr.bf16.mxu0 %v400
    %1074 = vmatmul.mubr.bf16.gmra.mrb[0].mxu0 %v399
    %v1075 = vpop.f32.mrb[0].mxu0
    %v1076 = vadd.f32 %v656, %v1075
    %v1077 = vpop.f32.mrb[0].mxu0
    %v1078 = vpop.f32.mrb[0].mxu0
    %v1079 = vadd.f32 %v656, %v1078
    %v1080 = vpop.f32.mrb[0].mxu0
    %1081 = vmatprep.mubr.bf16.mxu0 %v407
    %1082 = vmatmul.mubr.bf16.gmra.mrb[0].mxu0 %v406
    %v1083 = vpop.f32.mrb[0].mxu0
    %v1084 = vadd.f32 %v656, %v1083
    %v1085 = vpop.f32.mrb[0].mxu0
    %v1086 = vpop.f32.mrb[0].mxu0
    %v1087 = vadd.f32 %v656, %v1086
    %v1088 = vpop.f32.mrb[0].mxu0
    %1089 = vmatprep.mubr.bf16.mxu0 %v414
    %1090 = vmatmul.mubr.bf16.gmra.mrb[0].mxu0 %v413
    %v1091 = vpop.f32.mrb[0].mxu0
    %v1092 = vadd.f32 %v656, %v1091
    %v1093 = vpop.f32.mrb[0].mxu0
    %v1094 = vpop.f32.mrb[0].mxu0
    %v1095 = vadd.f32 %v656, %v1094
    %v1096 = vpop.f32.mrb[0].mxu0
    %1097 = vmatprep.mubr.bf16.mxu0 %v421
    %1098 = vmatmul.mubr.bf16.gmra.mrb[0].mxu0 %v420
    %v1099 = vpop.f32.mrb[0].mxu0
    %v1100 = vadd.f32 %v656, %v1099
    %v1101 = vpop.f32.mrb[0].mxu0
    %v1102 = vpop.f32.mrb[0].mxu0
    %v1103 = vadd.f32 %v656, %v1102
    %v1104 = vpop.f32.mrb[0].mxu0
    %1105 = vmatprep.mubr.bf16.mxu0 %v428
    %1106 = vmatmul.mubr.bf16.gmra.mrb[0].mxu0 %v427
    %v1107 = vpop.f32.mrb[0].mxu0
    %v1108 = vadd.f32 %v656, %v1107
    %v1109 = vpop.f32.mrb[0].mxu0
    %v1110 = vpop.f32.mrb[0].mxu0
    %v1111 = vadd.f32 %v656, %v1110
    %v1112 = vpop.f32.mrb[0].mxu0
    %1113 = vmatprep.mubr.bf16.mxu0 %v435
    %1114 = vmatmul.mubr.bf16.gmra.mrb[0].mxu0 %v434
    %v1115 = vpop.f32.mrb[0].mxu0
    %v1116 = vadd.f32 %v656, %v1115
    %v1117 = vpop.f32.mrb[0].mxu0
    %v1118 = vpop.f32.mrb[0].mxu0
    %v1119 = vadd.f32 %v656, %v1118
    %v1120 = vpop.f32.mrb[0].mxu0
    %1121 = vmatprep.mubr.bf16.mxu0 %v442
    %1122 = vmatmul.mubr.bf16.gmra.mrb[0].mxu0 %v441
    %v1123 = vpop.f32.mrb[0].mxu0
    %v1124 = vadd.f32 %v656, %v1123
    %v1125 = vpop.f32.mrb[0].mxu0
    %v1126 = vpop.f32.mrb[0].mxu0
    %v1127 = vadd.f32 %v656, %v1126
    %v1128 = vpop.f32.mrb[0].mxu0
    %1129 = vmatprep.mubr.bf16.mxu0 %v449
    %1130 = vmatmul.mubr.bf16.gmra.mrb[0].mxu0 %v448
    %v1131 = vpop.f32.mrb[0].mxu0
    %v1132 = vadd.f32 %v656, %v1131
    %v1133 = vpop.f32.mrb[0].mxu0
    %v1134 = vpop.f32.mrb[0].mxu0
    %v1135 = vadd.f32 %v656, %v1134
    %v1136 = vpop.f32.mrb[0].mxu0
    %1137 = vmatprep.mubr.bf16.mxu0 %v456
    %1138 = vmatmul.mubr.bf16.gmra.mrb[0].mxu0 %v455
    %v1139 = vpop.f32.mrb[0].mxu0
    %v1140 = vadd.f32 %v656, %v1139
    %v1141 = vpop.f32.mrb[0].mxu0
    %v1142 = vpop.f32.mrb[0].mxu0
    %v1143 = vadd.f32 %v656, %v1142
    %v1144 = vpop.f32.mrb[0].mxu0
    %1145 = vmatprep.mubr.bf16.mxu0 %v463
    %1146 = vmatmul.mubr.bf16.gmra.mrb[0].mxu0 %v462
    %v1147 = vpop.f32.mrb[0].mxu0
    %v1148 = vadd.f32 %v656, %v1147
    %v1149 = vpop.f32.mrb[0].mxu0
    %v1150 = vpop.f32.mrb[0].mxu0
    %v1151 = vadd.f32 %v656, %v1150
    %v1152 = vpop.f32.mrb[0].mxu0
    %1153 = vmatprep.mubr.bf16.mxu0 %v470
    %1154 = vmatmul.mubr.bf16.gmra.mrb[0].mxu0 %v469
    %v1155 = vpop.f32.mrb[0].mxu0
    %v1156 = vadd.f32 %v656, %v1155
    %v1157 = vpop.f32.mrb[0].mxu0
    %v1158 = vpop.f32.mrb[0].mxu0
    %v1159 = vadd.f32 %v656, %v1158
    %v1160 = vpop.f32.mrb[0].mxu0
    %1161 = vmatprep.mubr.bf16.mxu0 %v477
    %1162 = vmatmul.mubr.bf16.gmra.mrb[0].mxu0 %v476
    %v1163 = vpop.f32.mrb[0].mxu0
    %v1164 = vadd.f32 %v656, %v1163
    %v1165 = vpop.f32.mrb[0].mxu0
    %v1166 = vpop.f32.mrb[0].mxu0
    %v1167 = vadd.f32 %v656, %v1166
    %v1168 = vpop.f32.mrb[0].mxu0
    %1169 = vmatprep.mubr.bf16.mxu0 %v484
    %1170 = vmatmul.mubr.bf16.gmra.mrb[0].mxu0 %v483
    %v1171 = vpop.f32.mrb[0].mxu0
    %v1172 = vadd.f32 %v656, %v1171
    %v1173 = vpop.f32.mrb[0].mxu0
    %v1174 = vpop.f32.mrb[0].mxu0
    %v1175 = vadd.f32 %v656, %v1174
    %v1176 = vpop.f32.mrb[0].mxu0
    %1177 = vmatprep.mubr.bf16.mxu0 %v491
    %1178 = vmatmul.mubr.bf16.gmra.mrb[0].mxu0 %v490
    %v1179 = vpop.f32.mrb[0].mxu0
    %v1180 = vadd.f32 %v656, %v1179
    %v1181 = vpop.f32.mrb[0].mxu0
    %v1182 = vpop.f32.mrb[0].mxu0
    %v1183 = vadd.f32 %v656, %v1182
    %v1184 = vpop.f32.mrb[0].mxu0
    %1185 = vmatprep.mubr.bf16.mxu0 %v498
    %1186 = vmatmul.mubr.bf16.gmra.mrb[0].mxu0 %v497
    %v1187 = vpop.f32.mrb[0].mxu0
    %v1188 = vadd.f32 %v656, %v1187
    %v1189 = vpop.f32.mrb[0].mxu0
    %v1190 = vpop.f32.mrb[0].mxu0
    %v1191 = vadd.f32 %v656, %v1190
    %v1192 = vpop.f32.mrb[0].mxu0
    %1193 = vmatprep.mubr.bf16.mxu0 %v505
    %1194 = vmatmul.mubr.bf16.gmra.mrb[0].mxu0 %v504
    %v1195 = vpop.f32.mrb[0].mxu0
    %v1196 = vadd.f32 %v656, %v1195
    %v1197 = vpop.f32.mrb[0].mxu0
    %v1198 = vpop.f32.mrb[0].mxu0
    %v1199 = vadd.f32 %v656, %v1198
    %v1200 = vpop.f32.mrb[0].mxu0
    %1201 = vmatprep.mubr.bf16.mxu0 %v512
    %1202 = vmatmul.mubr.bf16.gmra.mrb[0].mxu0 %v511
    %v1203 = vpop.f32.mrb[0].mxu0
    %v1204 = vadd.f32 %v656, %v1203
    %v1205 = vpop.f32.mrb[0].mxu0
    %v1206 = vpop.f32.mrb[0].mxu0
    %v1207 = vadd.f32 %v656, %v1206
    %v1208 = vpop.f32.mrb[0].mxu0
    %1209 = vmatprep.mubr.bf16.mxu0 %v519
    %1210 = vmatmul.mubr.bf16.gmra.mrb[0].mxu0 %v518
    %v1211 = vpop.f32.mrb[0].mxu0
    %v1212 = vadd.f32 %v656, %v1211
    %v1213 = vpop.f32.mrb[0].mxu0
    %v1214 = vpop.f32.mrb[0].mxu0
    %v1215 = vadd.f32 %v656, %v1214
    %v1216 = vpop.f32.mrb[0].mxu0
    %1217 = vmatprep.mubr.bf16.mxu0 %v526
    %1218 = vmatmul.mubr.bf16.gmra.mrb[0].mxu0 %v525
    %v1219 = vpop.f32.mrb[0].mxu0
    %v1220 = vadd.f32 %v656, %v1219
    %v1221 = vpop.f32.mrb[0].mxu0
    %v1222 = vpop.f32.mrb[0].mxu0
    %v1223 = vadd.f32 %v656, %v1222
    %v1224 = vpop.f32.mrb[0].mxu0
    %1225 = vmatprep.mubr.bf16.mxu0 %v533
    %1226 = vmatmul.mubr.bf16.gmra.mrb[0].mxu0 %v532
    %v1227 = vpop.f32.mrb[0].mxu0
    %v1228 = vadd.f32 %v656, %v1227
    %v1229 = vpop.f32.mrb[0].mxu0
    %v1230 = vpop.f32.mrb[0].mxu0
    %v1231 = vadd.f32 %v656, %v1230
    %v1232 = vpop.f32.mrb[0].mxu0
    %1233 = vmatprep.mubr.bf16.mxu0 %v540
    %1234 = vmatmul.mubr.bf16.gmra.mrb[0].mxu0 %v539
    %v1235 = vpop.f32.mrb[0].mxu0
    %v1236 = vadd.f32 %v656, %v1235
    %v1237 = vpop.f32.mrb[0].mxu0
    %v1238 = vpop.f32.mrb[0].mxu0
    %v1239 = vadd.f32 %v656, %v1238
    %v1240 = vpop.f32.mrb[0].mxu0
    %1241 = vmatprep.mubr.bf16.mxu0 %v547
    %1242 = vmatmul.mubr.bf16.gmra.mrb[0].mxu0 %v546
    %v1243 = vpop.f32.mrb[0].mxu0
    %v1244 = vadd.f32 %v656, %v1243
    %v1245 = vpop.f32.mrb[0].mxu0
    %v1246 = vpop.f32.mrb[0].mxu0
    %v1247 = vadd.f32 %v656, %v1246
    %v1248 = vpop.f32.mrb[0].mxu0
    %1249 = vdwg.mxu0
    %1250 = vmatprep.subr.bf16.mxu0 0
    %1251 = vmatpush1.bf16.msra.mxu0 %v870
    %1252 = vmatprep.subr.bf16.mxu0 0
    %1253 = vmatpush1.bf16.msra.mxu0 %v871
    %1254 = vmatprep.subr.bf16.mxu0 0
    %1255 = vmatpush1.bf16.msra.mxu0 %v872
    %1256 = vmatprep.subr.bf16.mxu0 0
    %1257 = vmatpush1.bf16.msra.mxu0 %v873
    %1258 = vmatprep.subr.bf16.mxu0 0
    %1259 = vmatpush1.bf16.msra.mxu0 %v874
    %1260 = vmatprep.subr.bf16.mxu0 0
    %1261 = vmatpush1.bf16.msra.mxu0 %v875
    %1262 = vmatprep.subr.bf16.mxu0 0
    %1263 = vmatpush1.bf16.msra.mxu0 %v876
    %1264 = vmatprep.subr.bf16.mxu0 0
    %1265 = vmatpush1.bf16.msra.mxu0 %v877
    %1266 = vmatprep.subr.bf16.mxu0 0
    %1267 = vmatpush1.bf16.msra.mxu0 %v878
    %1268 = vmatprep.subr.bf16.mxu0 0
    %1269 = vmatpush1.bf16.msra.mxu0 %v879
    %1270 = vmatprep.subr.bf16.mxu0 0
    %1271 = vmatpush1.bf16.msra.mxu0 %v880
    %1272 = vmatprep.subr.bf16.mxu0 0
    %1273 = vmatpush1.bf16.msra.mxu0 %v881
    %1274 = vmatprep.subr.bf16.mxu0 0
    %1275 = vmatpush1.bf16.msra.mxu0 %v882
    %1276 = vmatprep.subr.bf16.mxu0 0
    %1277 = vmatpush1.bf16.msra.mxu0 %v883
    %1278 = vmatprep.subr.bf16.mxu0 0
    %1279 = vmatpush1.bf16.msra.mxu0 %v884
    %1280 = vmatprep.subr.bf16.mxu0 0
    %1281 = vmatpush1.bf16.msra.mxu0 %v885
    %1282 = vmatprep.mubr.bf16.mxu0 %v388
    %1283 = vmatmul.mubr.bf16.gmra.mrb[0].mxu0 %v387
    %v1284 = vpop.f32.mrb[0].mxu0
    %v1285 = vadd.f32 %v1060, %v1284
    %v1286 = vpop.f32.mrb[0].mxu0
    %v1287 = vpop.f32.mrb[0].mxu0
    %v1288 = vadd.f32 %v1063, %v1287
    %v1289 = vpop.f32.mrb[0].mxu0
    %1290 = vmatprep.mubr.bf16.mxu0 %v395
    %1291 = vmatmul.mubr.bf16.gmra.mrb[0].mxu0 %v394
    %v1292 = vpop.f32.mrb[0].mxu0
    %v1293 = vadd.f32 %v1068, %v1292
    %v1294 = vpop.f32.mrb[0].mxu0
    %v1295 = vpop.f32.mrb[0].mxu0
    %v1296 = vadd.f32 %v1071, %v1295
    %v1297 = vpop.f32.mrb[0].mxu0
    %1298 = vmatprep.mubr.bf16.mxu0 %v402
    %1299 = vmatmul.mubr.bf16.gmra.mrb[0].mxu0 %v401
    %v1300 = vpop.f32.mrb[0].mxu0
    %v1301 = vadd.f32 %v1076, %v1300
    %v1302 = vpop.f32.mrb[0].mxu0
    %v1303 = vpop.f32.mrb[0].mxu0
    %v1304 = vadd.f32 %v1079, %v1303
    %v1305 = vpop.f32.mrb[0].mxu0
    %1306 = vmatprep.mubr.bf16.mxu0 %v409
    %1307 = vmatmul.mubr.bf16.gmra.mrb[0].mxu0 %v408
    %v1308 = vpop.f32.mrb[0].mxu0
    %v1309 = vadd.f32 %v1084, %v1308
    %v1310 = vpop.f32.mrb[0].mxu0
    %v1311 = vpop.f32.mrb[0].mxu0
    %v1312 = vadd.f32 %v1087, %v1311
    %v1313 = vpop.f32.mrb[0].mxu0
    %1314 = vmatprep.mubr.bf16.mxu0 %v416
    %1315 = vmatmul.mubr.bf16.gmra.mrb[0].mxu0 %v415
    %v1316 = vpop.f32.mrb[0].mxu0
    %v1317 = vadd.f32 %v1092, %v1316
    %v1318 = vpop.f32.mrb[0].mxu0
    %v1319 = vpop.f32.mrb[0].mxu0
    %v1320 = vadd.f32 %v1095, %v1319
    %v1321 = vpop.f32.mrb[0].mxu0
    %1322 = vmatprep.mubr.bf16.mxu0 %v423
    %1323 = vmatmul.mubr.bf16.gmra.mrb[0].mxu0 %v422
    %v1324 = vpop.f32.mrb[0].mxu0
    %v1325 = vadd.f32 %v1100, %v1324
    %v1326 = vpop.f32.mrb[0].mxu0
    %v1327 = vpop.f32.mrb[0].mxu0
    %v1328 = vadd.f32 %v1103, %v1327
    %v1329 = vpop.f32.mrb[0].mxu0
    %1330 = vmatprep.mubr.bf16.mxu0 %v430
    %1331 = vmatmul.mubr.bf16.gmra.mrb[0].mxu0 %v429
    %v1332 = vpop.f32.mrb[0].mxu0
    %v1333 = vadd.f32 %v1108, %v1332
    %v1334 = vpop.f32.mrb[0].mxu0
    %v1335 = vpop.f32.mrb[0].mxu0
    %v1336 = vadd.f32 %v1111, %v1335
    %v1337 = vpop.f32.mrb[0].mxu0
    %1338 = vmatprep.mubr.bf16.mxu0 %v437
    %1339 = vmatmul.mubr.bf16.gmra.mrb[0].mxu0 %v436
    %v1340 = vpop.f32.mrb[0].mxu0
    %v1341 = vadd.f32 %v1116, %v1340
    %v1342 = vpop.f32.mrb[0].mxu0
    %v1343 = vpop.f32.mrb[0].mxu0
    %v1344 = vadd.f32 %v1119, %v1343
    %v1345 = vpop.f32.mrb[0].mxu0
    %1346 = vmatprep.mubr.bf16.mxu0 %v444
    %1347 = vmatmul.mubr.bf16.gmra.mrb[0].mxu0 %v443
    %v1348 = vpop.f32.mrb[0].mxu0
    %v1349 = vadd.f32 %v1124, %v1348
    %v1350 = vpop.f32.mrb[0].mxu0
    %v1351 = vpop.f32.mrb[0].mxu0
    %v1352 = vadd.f32 %v1127, %v1351
    %v1353 = vpop.f32.mrb[0].mxu0
    %1354 = vmatprep.mubr.bf16.mxu0 %v451
    %1355 = vmatmul.mubr.bf16.gmra.mrb[0].mxu0 %v450
    %v1356 = vpop.f32.mrb[0].mxu0
    %v1357 = vadd.f32 %v1132, %v1356
    %v1358 = vpop.f32.mrb[0].mxu0
    %v1359 = vpop.f32.mrb[0].mxu0
    %v1360 = vadd.f32 %v1135, %v1359
    %v1361 = vpop.f32.mrb[0].mxu0
    %1362 = vmatprep.mubr.bf16.mxu0 %v458
    %1363 = vmatmul.mubr.bf16.gmra.mrb[0].mxu0 %v457
    %v1364 = vpop.f32.mrb[0].mxu0
    %v1365 = vadd.f32 %v1140, %v1364
    %v1366 = vpop.f32.mrb[0].mxu0
    %v1367 = vpop.f32.mrb[0].mxu0
    %v1368 = vadd.f32 %v1143, %v1367
    %v1369 = vpop.f32.mrb[0].mxu0
    %1370 = vmatprep.mubr.bf16.mxu0 %v465
    %1371 = vmatmul.mubr.bf16.gmra.mrb[0].mxu0 %v464
    %v1372 = vpop.f32.mrb[0].mxu0
    %v1373 = vadd.f32 %v1148, %v1372
    %v1374 = vpop.f32.mrb[0].mxu0
    %v1375 = vpop.f32.mrb[0].mxu0
    %v1376 = vadd.f32 %v1151, %v1375
    %v1377 = vpop.f32.mrb[0].mxu0
    %1378 = vmatprep.mubr.bf16.mxu0 %v472
    %1379 = vmatmul.mubr.bf16.gmra.mrb[0].mxu0 %v471
    %v1380 = vpop.f32.mrb[0].mxu0
    %v1381 = vadd.f32 %v1156, %v1380
    %v1382 = vpop.f32.mrb[0].mxu0
    %v1383 = vpop.f32.mrb[0].mxu0
    %v1384 = vadd.f32 %v1159, %v1383
    %v1385 = vpop.f32.mrb[0].mxu0
    %1386 = vmatprep.mubr.bf16.mxu0 %v479
    %1387 = vmatmul.mubr.bf16.gmra.mrb[0].mxu0 %v478
    %v1388 = vpop.f32.mrb[0].mxu0
    %v1389 = vadd.f32 %v1164, %v1388
    %v1390 = vpop.f32.mrb[0].mxu0
    %v1391 = vpop.f32.mrb[0].mxu0
    %v1392 = vadd.f32 %v1167, %v1391
    %v1393 = vpop.f32.mrb[0].mxu0
    %1394 = vmatprep.mubr.bf16.mxu0 %v486
    %1395 = vmatmul.mubr.bf16.gmra.mrb[0].mxu0 %v485
    %v1396 = vpop.f32.mrb[0].mxu0
    %v1397 = vadd.f32 %v1172, %v1396
    %v1398 = vpop.f32.mrb[0].mxu0
    %v1399 = vpop.f32.mrb[0].mxu0
    %v1400 = vadd.f32 %v1175, %v1399
    %v1401 = vpop.f32.mrb[0].mxu0
    %1402 = vmatprep.mubr.bf16.mxu0 %v493
    %1403 = vmatmul.mubr.bf16.gmra.mrb[0].mxu0 %v492
    %v1404 = vpop.f32.mrb[0].mxu0
    %v1405 = vadd.f32 %v1180, %v1404
    %v1406 = vpop.f32.mrb[0].mxu0
    %v1407 = vpop.f32.mrb[0].mxu0
    %v1408 = vadd.f32 %v1183, %v1407
    %v1409 = vpop.f32.mrb[0].mxu0
    %1410 = vmatprep.mubr.bf16.mxu0 %v500
    %1411 = vmatmul.mubr.bf16.gmra.mrb[0].mxu0 %v499
    %v1412 = vpop.f32.mrb[0].mxu0
    %v1413 = vadd.f32 %v1188, %v1412
    %v1414 = vpop.f32.mrb[0].mxu0
    %v1415 = vpop.f32.mrb[0].mxu0
    %v1416 = vadd.f32 %v1191, %v1415
    %v1417 = vpop.f32.mrb[0].mxu0
    %1418 = vmatprep.mubr.bf16.mxu0 %v507
    %1419 = vmatmul.mubr.bf16.gmra.mrb[0].mxu0 %v506
    %v1420 = vpop.f32.mrb[0].mxu0
    %v1421 = vadd.f32 %v1196, %v1420
    %v1422 = vpop.f32.mrb[0].mxu0
    %v1423 = vpop.f32.mrb[0].mxu0
    %v1424 = vadd.f32 %v1199, %v1423
    %v1425 = vpop.f32.mrb[0].mxu0
    %1426 = vmatprep.mubr.bf16.mxu0 %v514
    %1427 = vmatmul.mubr.bf16.gmra.mrb[0].mxu0 %v513
    %v1428 = vpop.f32.mrb[0].mxu0
    %v1429 = vadd.f32 %v1204, %v1428
    %v1430 = vpop.f32.mrb[0].mxu0
    %v1431 = vpop.f32.mrb[0].mxu0
    %v1432 = vadd.f32 %v1207, %v1431
    %v1433 = vpop.f32.mrb[0].mxu0
    %1434 = vmatprep.mubr.bf16.mxu0 %v521
    %1435 = vmatmul.mubr.bf16.gmra.mrb[0].mxu0 %v520
    %v1436 = vpop.f32.mrb[0].mxu0
    %v1437 = vadd.f32 %v1212, %v1436
    %v1438 = vpop.f32.mrb[0].mxu0
    %v1439 = vpop.f32.mrb[0].mxu0
    %v1440 = vadd.f32 %v1215, %v1439
    %v1441 = vpop.f32.mrb[0].mxu0
    %1442 = vmatprep.mubr.bf16.mxu0 %v528
    %1443 = vmatmul.mubr.bf16.gmra.mrb[0].mxu0 %v527
    %v1444 = vpop.f32.mrb[0].mxu0
    %v1445 = vadd.f32 %v1220, %v1444
    %v1446 = vpop.f32.mrb[0].mxu0
    %v1447 = vpop.f32.mrb[0].mxu0
    %v1448 = vadd.f32 %v1223, %v1447
    %v1449 = vpop.f32.mrb[0].mxu0
    %1450 = vmatprep.mubr.bf16.mxu0 %v535
    %1451 = vmatmul.mubr.bf16.gmra.mrb[0].mxu0 %v534
    %v1452 = vpop.f32.mrb[0].mxu0
    %v1453 = vadd.f32 %v1228, %v1452
    %v1454 = vpop.f32.mrb[0].mxu0
    %v1455 = vpop.f32.mrb[0].mxu0
    %v1456 = vadd.f32 %v1231, %v1455
    %v1457 = vpop.f32.mrb[0].mxu0
    %1458 = vmatprep.mubr.bf16.mxu0 %v542
    %1459 = vmatmul.mubr.bf16.gmra.mrb[0].mxu0 %v541
    %v1460 = vpop.f32.mrb[0].mxu0
    %v1461 = vadd.f32 %v1236, %v1460
    %v1462 = vpop.f32.mrb[0].mxu0
    %v1463 = vpop.f32.mrb[0].mxu0
    %v1464 = vadd.f32 %v1239, %v1463
    %v1465 = vpop.f32.mrb[0].mxu0
    %1466 = vmatprep.mubr.bf16.mxu0 %v549
    %1467 = vmatmul.mubr.bf16.gmra.mrb[0].mxu0 %v548
    %v1468 = vpop.f32.mrb[0].mxu0
    %v1469 = vadd.f32 %v1244, %v1468
    %v1470 = vpop.f32.mrb[0].mxu0
    %v1471 = vpop.f32.mrb[0].mxu0
    %v1472 = vadd.f32 %v1247, %v1471
    %v1473 = vpop.f32.mrb[0].mxu0
    %1474 = vdwg.mxu0
    %1475 = vmatprep.subr.bf16.mxu0 0
    %1476 = vmatpush1.bf16.msra.mxu0 %v886
    %1477 = vmatprep.subr.bf16.mxu0 0
    %1478 = vmatpush1.bf16.msra.mxu0 %v887
    %1479 = vmatprep.subr.bf16.mxu0 0
    %1480 = vmatpush1.bf16.msra.mxu0 %v888
    %1481 = vmatprep.subr.bf16.mxu0 0
    %1482 = vmatpush1.bf16.msra.mxu0 %v889
    %1483 = vmatprep.subr.bf16.mxu0 0
    %1484 = vmatpush1.bf16.msra.mxu0 %v890
    %1485 = vmatprep.subr.bf16.mxu0 0
    %1486 = vmatpush1.bf16.msra.mxu0 %v891
    %1487 = vmatprep.subr.bf16.mxu0 0
    %1488 = vmatpush1.bf16.msra.mxu0 %v892
    %1489 = vmatprep.subr.bf16.mxu0 0
    %1490 = vmatpush1.bf16.msra.mxu0 %v893
    %1491 = vmatprep.subr.bf16.mxu0 0
    %1492 = vmatpush1.bf16.msra.mxu0 %v894
    %1493 = vmatprep.subr.bf16.mxu0 0
    %1494 = vmatpush1.bf16.msra.mxu0 %v895
    %1495 = vmatprep.subr.bf16.mxu0 0
    %1496 = vmatpush1.bf16.msra.mxu0 %v896
    %1497 = vmatprep.subr.bf16.mxu0 0
    %1498 = vmatpush1.bf16.msra.mxu0 %v897
    %1499 = vmatprep.subr.bf16.mxu0 0
    %1500 = vmatpush1.bf16.msra.mxu0 %v898
    %1501 = vmatprep.subr.bf16.mxu0 0
    %1502 = vmatpush1.bf16.msra.mxu0 %v899
    %1503 = vmatprep.subr.bf16.mxu0 0
    %1504 = vmatpush1.bf16.msra.mxu0 %v900
    %1505 = vmatprep.subr.bf16.mxu0 0
    %1506 = vmatpush1.bf16.msra.mxu0 %v901
    %1507 = vmatprep.mubr.bf16.mxu0 %v390
    %1508 = vmatmul.mubr.bf16.gmra.mrb[0].mxu0 %v389
    %v1509 = vpop.f32.mrb[0].mxu0
    %v1510 = vadd.f32 %v1285, %v1509
    %v1511 = vpop.f32.mrb[0].mxu0
    %v1512 = vpop.f32.mrb[0].mxu0
    %v1513 = vadd.f32 %v1288, %v1512
    %v1514 = vpop.f32.mrb[0].mxu0
    %1515 = vmatprep.mubr.bf16.mxu0 %v397
    %1516 = vmatmul.mubr.bf16.gmra.mrb[0].mxu0 %v396
    %v1517 = vpop.f32.mrb[0].mxu0
    %v1518 = vadd.f32 %v1293, %v1517
    %v1519 = vpop.f32.mrb[0].mxu0
    %v1520 = vpop.f32.mrb[0].mxu0
    %v1521 = vadd.f32 %v1296, %v1520
    %v1522 = vpop.f32.mrb[0].mxu0
    %1523 = vmatprep.mubr.bf16.mxu0 %v404
    %1524 = vmatmul.mubr.bf16.gmra.mrb[0].mxu0 %v403
    %v1525 = vpop.f32.mrb[0].mxu0
    %v1526 = vadd.f32 %v1301, %v1525
    %v1527 = vpop.f32.mrb[0].mxu0
    %v1528 = vpop.f32.mrb[0].mxu0
    %v1529 = vadd.f32 %v1304, %v1528
    %v1530 = vpop.f32.mrb[0].mxu0
    %1531 = vmatprep.mubr.bf16.mxu0 %v411
    %1532 = vmatmul.mubr.bf16.gmra.mrb[0].mxu0 %v410
    %v1533 = vpop.f32.mrb[0].mxu0
    %v1534 = vadd.f32 %v1309, %v1533
    %v1535 = vpop.f32.mrb[0].mxu0
    %v1536 = vpop.f32.mrb[0].mxu0
    %v1537 = vadd.f32 %v1312, %v1536
    %v1538 = vpop.f32.mrb[0].mxu0
    %1539 = vmatprep.mubr.bf16.mxu0 %v418
    %1540 = vmatmul.mubr.bf16.gmra.mrb[0].mxu0 %v417
    %v1541 = vpop.f32.mrb[0].mxu0
    %v1542 = vadd.f32 %v1317, %v1541
    %v1543 = vpop.f32.mrb[0].mxu0
    %v1544 = vpop.f32.mrb[0].mxu0
    %v1545 = vadd.f32 %v1320, %v1544
    %v1546 = vpop.f32.mrb[0].mxu0
    %1547 = vmatprep.mubr.bf16.mxu0 %v425
    %1548 = vmatmul.mubr.bf16.gmra.mrb[0].mxu0 %v424
    %v1549 = vpop.f32.mrb[0].mxu0
    %v1550 = vadd.f32 %v1325, %v1549
    %v1551 = vpop.f32.mrb[0].mxu0
    %v1552 = vpop.f32.mrb[0].mxu0
    %v1553 = vadd.f32 %v1328, %v1552
    %v1554 = vpop.f32.mrb[0].mxu0
    %1555 = vmatprep.mubr.bf16.mxu0 %v432
    %1556 = vmatmul.mubr.bf16.gmra.mrb[0].mxu0 %v431
    %v1557 = vpop.f32.mrb[0].mxu0
    %v1558 = vadd.f32 %v1333, %v1557
    %v1559 = vpop.f32.mrb[0].mxu0
    %v1560 = vpop.f32.mrb[0].mxu0
    %v1561 = vadd.f32 %v1336, %v1560
    %v1562 = vpop.f32.mrb[0].mxu0
    %1563 = vmatprep.mubr.bf16.mxu0 %v439
    %1564 = vmatmul.mubr.bf16.gmra.mrb[0].mxu0 %v438
    %v1565 = vpop.f32.mrb[0].mxu0
    %v1566 = vadd.f32 %v1341, %v1565
    %v1567 = vpop.f32.mrb[0].mxu0
    %v1568 = vpop.f32.mrb[0].mxu0
    %v1569 = vadd.f32 %v1344, %v1568
    %v1570 = vpop.f32.mrb[0].mxu0
    %1571 = vmatprep.mubr.bf16.mxu0 %v446
    %1572 = vmatmul.mubr.bf16.gmra.mrb[0].mxu0 %v445
    %v1573 = vpop.f32.mrb[0].mxu0
    %v1574 = vadd.f32 %v1349, %v1573
    %v1575 = vpop.f32.mrb[0].mxu0
    %v1576 = vpop.f32.mrb[0].mxu0
    %v1577 = vadd.f32 %v1352, %v1576
    %v1578 = vpop.f32.mrb[0].mxu0
    %1579 = vmatprep.mubr.bf16.mxu0 %v453
    %1580 = vmatmul.mubr.bf16.gmra.mrb[0].mxu0 %v452
    %v1581 = vpop.f32.mrb[0].mxu0
    %v1582 = vadd.f32 %v1357, %v1581
    %v1583 = vpop.f32.mrb[0].mxu0
    %v1584 = vpop.f32.mrb[0].mxu0
    %v1585 = vadd.f32 %v1360, %v1584
    %v1586 = vpop.f32.mrb[0].mxu0
    %1587 = vmatprep.mubr.bf16.mxu0 %v460
    %1588 = vmatmul.mubr.bf16.gmra.mrb[0].mxu0 %v459
    %v1589 = vpop.f32.mrb[0].mxu0
    %v1590 = vadd.f32 %v1365, %v1589
    %v1591 = vpop.f32.mrb[0].mxu0
    %v1592 = vpop.f32.mrb[0].mxu0
    %v1593 = vadd.f32 %v1368, %v1592
    %v1594 = vpop.f32.mrb[0].mxu0
    %1595 = vmatprep.mubr.bf16.mxu0 %v467
    %1596 = vmatmul.mubr.bf16.gmra.mrb[0].mxu0 %v466
    %v1597 = vpop.f32.mrb[0].mxu0
    %v1598 = vadd.f32 %v1373, %v1597
    %v1599 = vpop.f32.mrb[0].mxu0
    %v1600 = vpop.f32.mrb[0].mxu0
    %v1601 = vadd.f32 %v1376, %v1600
    %v1602 = vpop.f32.mrb[0].mxu0
    %1603 = vmatprep.mubr.bf16.mxu0 %v474
    %1604 = vmatmul.mubr.bf16.gmra.mrb[0].mxu0 %v473
    %v1605 = vpop.f32.mrb[0].mxu0
    %v1606 = vadd.f32 %v1381, %v1605
    %v1607 = vpop.f32.mrb[0].mxu0
    %v1608 = vpop.f32.mrb[0].mxu0
    %v1609 = vadd.f32 %v1384, %v1608
    %v1610 = vpop.f32.mrb[0].mxu0
    %1611 = vmatprep.mubr.bf16.mxu0 %v481
    %1612 = vmatmul.mubr.bf16.gmra.mrb[0].mxu0 %v480
    %v1613 = vpop.f32.mrb[0].mxu0
    %v1614 = vadd.f32 %v1389, %v1613
    %v1615 = vpop.f32.mrb[0].mxu0
    %v1616 = vpop.f32.mrb[0].mxu0
    %v1617 = vadd.f32 %v1392, %v1616
    %v1618 = vpop.f32.mrb[0].mxu0
    %1619 = vmatprep.mubr.bf16.mxu0 %v488
    %1620 = vmatmul.mubr.bf16.gmra.mrb[0].mxu0 %v487
    %v1621 = vpop.f32.mrb[0].mxu0
    %v1622 = vadd.f32 %v1397, %v1621
    %v1623 = vpop.f32.mrb[0].mxu0
    %v1624 = vpop.f32.mrb[0].mxu0
    %v1625 = vadd.f32 %v1400, %v1624
    %v1626 = vpop.f32.mrb[0].mxu0
    %1627 = vmatprep.mubr.bf16.mxu0 %v495
    %1628 = vmatmul.mubr.bf16.gmra.mrb[0].mxu0 %v494
    %v1629 = vpop.f32.mrb[0].mxu0
    %v1630 = vadd.f32 %v1405, %v1629
    %v1631 = vpop.f32.mrb[0].mxu0
    %v1632 = vpop.f32.mrb[0].mxu0
    %v1633 = vadd.f32 %v1408, %v1632
    %v1634 = vpop.f32.mrb[0].mxu0
    %1635 = vmatprep.mubr.bf16.mxu0 %v502
    %1636 = vmatmul.mubr.bf16.gmra.mrb[0].mxu0 %v501
    %v1637 = vpop.f32.mrb[0].mxu0
    %v1638 = vadd.f32 %v1413, %v1637
    %v1639 = vpop.f32.mrb[0].mxu0
    %v1640 = vpop.f32.mrb[0].mxu0
    %v1641 = vadd.f32 %v1416, %v1640
    %v1642 = vpop.f32.mrb[0].mxu0
    %1643 = vmatprep.mubr.bf16.mxu0 %v509
    %1644 = vmatmul.mubr.bf16.gmra.mrb[0].mxu0 %v508
    %v1645 = vpop.f32.mrb[0].mxu0
    %v1646 = vadd.f32 %v1421, %v1645
    %v1647 = vpop.f32.mrb[0].mxu0
    %v1648 = vpop.f32.mrb[0].mxu0
    %v1649 = vadd.f32 %v1424, %v1648
    %v1650 = vpop.f32.mrb[0].mxu0
    %1651 = vmatprep.mubr.bf16.mxu0 %v516
    %1652 = vmatmul.mubr.bf16.gmra.mrb[0].mxu0 %v515
    %v1653 = vpop.f32.mrb[0].mxu0
    %v1654 = vadd.f32 %v1429, %v1653
    %v1655 = vpop.f32.mrb[0].mxu0
    %v1656 = vpop.f32.mrb[0].mxu0
    %v1657 = vadd.f32 %v1432, %v1656
    %v1658 = vpop.f32.mrb[0].mxu0
    %1659 = vmatprep.mubr.bf16.mxu0 %v523
    %1660 = vmatmul.mubr.bf16.gmra.mrb[0].mxu0 %v522
    %v1661 = vpop.f32.mrb[0].mxu0
    %v1662 = vadd.f32 %v1437, %v1661
    %v1663 = vpop.f32.mrb[0].mxu0
    %v1664 = vpop.f32.mrb[0].mxu0
    %v1665 = vadd.f32 %v1440, %v1664
    %v1666 = vpop.f32.mrb[0].mxu0
    %1667 = vmatprep.mubr.bf16.mxu0 %v530
    %1668 = vmatmul.mubr.bf16.gmra.mrb[0].mxu0 %v529
    %v1669 = vpop.f32.mrb[0].mxu0
    %v1670 = vadd.f32 %v1445, %v1669
    %v1671 = vpop.f32.mrb[0].mxu0
    %v1672 = vpop.f32.mrb[0].mxu0
    %v1673 = vadd.f32 %v1448, %v1672
    %v1674 = vpop.f32.mrb[0].mxu0
    %1675 = vmatprep.mubr.bf16.mxu0 %v537
    %1676 = vmatmul.mubr.bf16.gmra.mrb[0].mxu0 %v536
    %v1677 = vpop.f32.mrb[0].mxu0
    %v1678 = vadd.f32 %v1453, %v1677
    %v1679 = vpop.f32.mrb[0].mxu0
    %v1680 = vpop.f32.mrb[0].mxu0
    %v1681 = vadd.f32 %v1456, %v1680
    %v1682 = vpop.f32.mrb[0].mxu0
    %1683 = vmatprep.mubr.bf16.mxu0 %v544
    %1684 = vmatmul.mubr.bf16.gmra.mrb[0].mxu0 %v543
    %v1685 = vpop.f32.mrb[0].mxu0
    %v1686 = vadd.f32 %v1461, %v1685
    %v1687 = vpop.f32.mrb[0].mxu0
    %v1688 = vpop.f32.mrb[0].mxu0
    %v1689 = vadd.f32 %v1464, %v1688
    %v1690 = vpop.f32.mrb[0].mxu0
    %1691 = vmatprep.mubr.bf16.mxu0 %v551
    %1692 = vmatmul.mubr.bf16.gmra.mrb[0].mxu0 %v550
    %v1693 = vpop.f32.mrb[0].mxu0
    %v1694 = vadd.f32 %v1469, %v1693
    %v1695 = vpop.f32.mrb[0].mxu0
    %v1696 = vpop.f32.mrb[0].mxu0
    %v1697 = vadd.f32 %v1472, %v1696
    %v1698 = vpop.f32.mrb[0].mxu0
    %1699 = vdwg.mxu0
    %1700 = vmatprep.subr.bf16.mxu0 0
    %1701 = vmatpush1.bf16.msra.mxu0 %v902
    %1702 = vmatprep.subr.bf16.mxu0 0
    %1703 = vmatpush1.bf16.msra.mxu0 0
    %1704 = vmatprep.subr.bf16.mxu0 0
    %1705 = vmatpush1.bf16.msra.mxu0 0
    %1706 = vmatprep.subr.bf16.mxu0 0
    %1707 = vmatpush1.bf16.msra.mxu0 0
    %1708 = vmatprep.subr.bf16.mxu0 0
    %1709 = vmatpush1.bf16.msra.mxu0 0
    %1710 = vmatprep.subr.bf16.mxu0 0
    %1711 = vmatpush1.bf16.msra.mxu0 0
    %1712 = vmatprep.subr.bf16.mxu0 0
    %1713 = vmatpush1.bf16.msra.mxu0 0
    %1714 = vmatprep.subr.bf16.mxu0 0
    %1715 = vmatpush1.bf16.msra.mxu0 0
    %1716 = vmatprep.subr.bf16.mxu0 0
    %1717 = vmatpush1.bf16.msra.mxu0 0
    %1718 = vmatprep.subr.bf16.mxu0 0
    %1719 = vmatpush1.bf16.msra.mxu0 0
    %1720 = vmatprep.subr.bf16.mxu0 0
    %1721 = vmatpush1.bf16.msra.mxu0 0
    %1722 = vmatprep.subr.bf16.mxu0 0
    %1723 = vmatpush1.bf16.msra.mxu0 0
    %1724 = vmatprep.subr.bf16.mxu0 0
    %1725 = vmatpush1.bf16.msra.mxu0 0
    %1726 = vmatprep.subr.bf16.mxu0 0
    %1727 = vmatpush1.bf16.msra.mxu0 0
    %1728 = vmatprep.subr.bf16.mxu0 0
    %1729 = vmatpush1.bf16.msra.mxu0 0
    %1730 = vmatprep.subr.bf16.mxu0 0
    %1731 = vmatpush1.bf16.msra.mxu0 0
    %1732 = vmatprep.mubr.bf16.mxu0 0
    %1733 = vmatmul.mubr.bf16.gmra.mrb[0].mxu0 %v954
    %v1734 = vpop.f32.mrb[0].mxu0
    %v1735 = vadd.f32 %v1510, %v1734
    %v1736 = vpop.f32.mrb[0].mxu0
    %v1737 = vpop.f32.mrb[0].mxu0
    %v1738 = vadd.f32 %v1513, %v1737
    %v1739 = vpop.f32.mrb[0].mxu0
    %1740 = vmatprep.mubr.bf16.mxu0 0
    %1741 = vmatmul.mubr.bf16.gmra.mrb[0].mxu0 %v957
    %v1742 = vpop.f32.mrb[0].mxu0
    %v1743 = vadd.f32 %v1518, %v1742
    %v1744 = vpop.f32.mrb[0].mxu0
    %v1745 = vpop.f32.mrb[0].mxu0
    %v1746 = vadd.f32 %v1521, %v1745
    %v1747 = vpop.f32.mrb[0].mxu0
    %1748 = vmatprep.mubr.bf16.mxu0 0
    %1749 = vmatmul.mubr.bf16.gmra.mrb[0].mxu0 %v960
    %v1750 = vpop.f32.mrb[0].mxu0
    %v1751 = vadd.f32 %v1526, %v1750
    %v1752 = vpop.f32.mrb[0].mxu0
    %v1753 = vpop.f32.mrb[0].mxu0
    %v1754 = vadd.f32 %v1529, %v1753
    %v1755 = vpop.f32.mrb[0].mxu0
    %1756 = vmatprep.mubr.bf16.mxu0 0
    %1757 = vmatmul.mubr.bf16.gmra.mrb[0].mxu0 %v963
    %v1758 = vpop.f32.mrb[0].mxu0
    %v1759 = vadd.f32 %v1534, %v1758
    %v1760 = vpop.f32.mrb[0].mxu0
    %v1761 = vpop.f32.mrb[0].mxu0
    %v1762 = vadd.f32 %v1537, %v1761
    %v1763 = vpop.f32.mrb[0].mxu0
    %1764 = vmatprep.mubr.bf16.mxu0 0
    %1765 = vmatmul.mubr.bf16.gmra.mrb[0].mxu0 %v966
    %v1766 = vpop.f32.mrb[0].mxu0
    %v1767 = vadd.f32 %v1542, %v1766
    %v1768 = vpop.f32.mrb[0].mxu0
    %v1769 = vpop.f32.mrb[0].mxu0
    %v1770 = vadd.f32 %v1545, %v1769
    %v1771 = vpop.f32.mrb[0].mxu0
    %1772 = vmatprep.mubr.bf16.mxu0 0
    %1773 = vmatmul.mubr.bf16.gmra.mrb[0].mxu0 %v969
    %v1774 = vpop.f32.mrb[0].mxu0
    %v1775 = vadd.f32 %v1550, %v1774
    %v1776 = vpop.f32.mrb[0].mxu0
    %v1777 = vpop.f32.mrb[0].mxu0
    %v1778 = vadd.f32 %v1553, %v1777
    %v1779 = vpop.f32.mrb[0].mxu0
    %1780 = vmatprep.mubr.bf16.mxu0 0
    %1781 = vmatmul.mubr.bf16.gmra.mrb[0].mxu0 %v972
    %v1782 = vpop.f32.mrb[0].mxu0
    %v1783 = vadd.f32 %v1558, %v1782
    %v1784 = vpop.f32.mrb[0].mxu0
    %v1785 = vpop.f32.mrb[0].mxu0
    %v1786 = vadd.f32 %v1561, %v1785
    %v1787 = vpop.f32.mrb[0].mxu0
    %1788 = vmatprep.mubr.bf16.mxu0 0
    %1789 = vmatmul.mubr.bf16.gmra.mrb[0].mxu0 %v975
    %v1790 = vpop.f32.mrb[0].mxu0
    %v1791 = vadd.f32 %v1566, %v1790
    %v1792 = vpop.f32.mrb[0].mxu0
    %v1793 = vpop.f32.mrb[0].mxu0
    %v1794 = vadd.f32 %v1569, %v1793
    %v1795 = vpop.f32.mrb[0].mxu0
    %1796 = vmatprep.mubr.bf16.mxu0 0
    %1797 = vmatmul.mubr.bf16.gmra.mrb[0].mxu0 %v978
    %v1798 = vpop.f32.mrb[0].mxu0
    %v1799 = vadd.f32 %v1574, %v1798
    %v1800 = vpop.f32.mrb[0].mxu0
    %v1801 = vpop.f32.mrb[0].mxu0
    %v1802 = vadd.f32 %v1577, %v1801
    %v1803 = vpop.f32.mrb[0].mxu0
    %1804 = vmatprep.mubr.bf16.mxu0 0
    %1805 = vmatmul.mubr.bf16.gmra.mrb[0].mxu0 %v981
    %v1806 = vpop.f32.mrb[0].mxu0
    %v1807 = vadd.f32 %v1582, %v1806
    %v1808 = vpop.f32.mrb[0].mxu0
    %v1809 = vpop.f32.mrb[0].mxu0
    %v1810 = vadd.f32 %v1585, %v1809
    %v1811 = vpop.f32.mrb[0].mxu0
    %1812 = vmatprep.mubr.bf16.mxu0 0
    %1813 = vmatmul.mubr.bf16.gmra.mrb[0].mxu0 %v984
    %v1814 = vpop.f32.mrb[0].mxu0
    %v1815 = vadd.f32 %v1590, %v1814
    %v1816 = vpop.f32.mrb[0].mxu0
    %v1817 = vpop.f32.mrb[0].mxu0
    %v1818 = vadd.f32 %v1593, %v1817
    %v1819 = vpop.f32.mrb[0].mxu0
    %1820 = vmatprep.mubr.bf16.mxu0 0
    %1821 = vmatmul.mubr.bf16.gmra.mrb[0].mxu0 %v987
    %v1822 = vpop.f32.mrb[0].mxu0
    %v1823 = vadd.f32 %v1598, %v1822
    %v1824 = vpop.f32.mrb[0].mxu0
    %v1825 = vpop.f32.mrb[0].mxu0
    %v1826 = vadd.f32 %v1601, %v1825
    %v1827 = vpop.f32.mrb[0].mxu0
    %1828 = vmatprep.mubr.bf16.mxu0 0
    %1829 = vmatmul.mubr.bf16.gmra.mrb[0].mxu0 %v990
    %v1830 = vpop.f32.mrb[0].mxu0
    %v1831 = vadd.f32 %v1606, %v1830
    %v1832 = vpop.f32.mrb[0].mxu0
    %v1833 = vpop.f32.mrb[0].mxu0
    %v1834 = vadd.f32 %v1609, %v1833
    %v1835 = vpop.f32.mrb[0].mxu0
    %1836 = vmatprep.mubr.bf16.mxu0 0
    %1837 = vmatmul.mubr.bf16.gmra.mrb[0].mxu0 %v993
    %v1838 = vpop.f32.mrb[0].mxu0
    %v1839 = vadd.f32 %v1614, %v1838
    %v1840 = vpop.f32.mrb[0].mxu0
    %v1841 = vpop.f32.mrb[0].mxu0
    %v1842 = vadd.f32 %v1617, %v1841
    %v1843 = vpop.f32.mrb[0].mxu0
    %1844 = vmatprep.mubr.bf16.mxu0 0
    %1845 = vmatmul.mubr.bf16.gmra.mrb[0].mxu0 %v996
    %v1846 = vpop.f32.mrb[0].mxu0
    %v1847 = vadd.f32 %v1622, %v1846
    %v1848 = vpop.f32.mrb[0].mxu0
    %v1849 = vpop.f32.mrb[0].mxu0
    %v1850 = vadd.f32 %v1625, %v1849
    %v1851 = vpop.f32.mrb[0].mxu0
    %1852 = vmatprep.mubr.bf16.mxu0 0
    %1853 = vmatmul.mubr.bf16.gmra.mrb[0].mxu0 %v999
    %v1854 = vpop.f32.mrb[0].mxu0
    %v1855 = vadd.f32 %v1630, %v1854
    %v1856 = vpop.f32.mrb[0].mxu0
    %v1857 = vpop.f32.mrb[0].mxu0
    %v1858 = vadd.f32 %v1633, %v1857
    %v1859 = vpop.f32.mrb[0].mxu0
    %1860 = vmatprep.mubr.bf16.mxu0 0
    %1861 = vmatmul.mubr.bf16.gmra.mrb[0].mxu0 %v1002
    %v1862 = vpop.f32.mrb[0].mxu0
    %v1863 = vadd.f32 %v1638, %v1862
    %v1864 = vpop.f32.mrb[0].mxu0
    %v1865 = vpop.f32.mrb[0].mxu0
    %v1866 = vadd.f32 %v1641, %v1865
    %v1867 = vpop.f32.mrb[0].mxu0
    %1868 = vmatprep.mubr.bf16.mxu0 0
    %1869 = vmatmul.mubr.bf16.gmra.mrb[0].mxu0 %v1005
    %v1870 = vpop.f32.mrb[0].mxu0
    %v1871 = vadd.f32 %v1646, %v1870
    %v1872 = vpop.f32.mrb[0].mxu0
    %v1873 = vpop.f32.mrb[0].mxu0
    %v1874 = vadd.f32 %v1649, %v1873
    %v1875 = vpop.f32.mrb[0].mxu0
    %1876 = vmatprep.mubr.bf16.mxu0 0
    %1877 = vmatmul.mubr.bf16.gmra.mrb[0].mxu0 %v1008
    %v1878 = vpop.f32.mrb[0].mxu0
    %v1879 = vadd.f32 %v1654, %v1878
    %v1880 = vpop.f32.mrb[0].mxu0
    %v1881 = vpop.f32.mrb[0].mxu0
    %v1882 = vadd.f32 %v1657, %v1881
    %v1883 = vpop.f32.mrb[0].mxu0
    %1884 = vmatprep.mubr.bf16.mxu0 0
    %1885 = vmatmul.mubr.bf16.gmra.mrb[0].mxu0 %v1011
    %v1886 = vpop.f32.mrb[0].mxu0
    %v1887 = vadd.f32 %v1662, %v1886
    %v1888 = vpop.f32.mrb[0].mxu0
    %v1889 = vpop.f32.mrb[0].mxu0
    %v1890 = vadd.f32 %v1665, %v1889
    %v1891 = vpop.f32.mrb[0].mxu0
    %1892 = vmatprep.mubr.bf16.mxu0 0
    %1893 = vmatmul.mubr.bf16.gmra.mrb[0].mxu0 %v1014
    %v1894 = vpop.f32.mrb[0].mxu0
    %v1895 = vadd.f32 %v1670, %v1894
    %v1896 = vpop.f32.mrb[0].mxu0
    %v1897 = vpop.f32.mrb[0].mxu0
    %v1898 = vadd.f32 %v1673, %v1897
    %v1899 = vpop.f32.mrb[0].mxu0
    %1900 = vmatprep.mubr.bf16.mxu0 0
    %1901 = vmatmul.mubr.bf16.gmra.mrb[0].mxu0 %v1017
    %v1902 = vpop.f32.mrb[0].mxu0
    %v1903 = vadd.f32 %v1678, %v1902
    %v1904 = vpop.f32.mrb[0].mxu0
    %v1905 = vpop.f32.mrb[0].mxu0
    %v1906 = vadd.f32 %v1681, %v1905
    %v1907 = vpop.f32.mrb[0].mxu0
    %1908 = vmatprep.mubr.bf16.mxu0 0
    %1909 = vmatmul.mubr.bf16.gmra.mrb[0].mxu0 %v1020
    %v1910 = vpop.f32.mrb[0].mxu0
    %v1911 = vadd.f32 %v1686, %v1910
    %v1912 = vpop.f32.mrb[0].mxu0
    %v1913 = vpop.f32.mrb[0].mxu0
    %v1914 = vadd.f32 %v1689, %v1913
    %v1915 = vpop.f32.mrb[0].mxu0
    %1916 = vmatprep.mubr.bf16.mxu0 0
    %1917 = vmatmul.mubr.bf16.gmra.mrb[0].mxu0 %v1023
    %v1918 = vpop.f32.mrb[0].mxu0
    %v1919 = vadd.f32 %v1694, %v1918
    %v1920 = vpop.f32.mrb[0].mxu0
    %v1921 = vpop.f32.mrb[0].mxu0
    %v1922 = vadd.f32 %v1697, %v1921
    %v1923 = vpop.f32.mrb[0].mxu0
    %1924 = vdwg.mxu0
    %v1925 = vmul.f32 %v1735, 0.1
    %v1926 = vmul.f32 %v1738, 0.1
    %v1927 = vmul.f32 %v1743, 0.1
    %v1928 = vmul.f32 %v1746, 0.1
    %v1929 = vmul.f32 %v1751, 0.1
    %v1930 = vmul.f32 %v1754, 0.1
    %v1931 = vmul.f32 %v1759, 0.1
    %v1932 = vmul.f32 %v1762, 0.1
    %v1933 = vmul.f32 %v1767, 0.1
    %v1934 = vmul.f32 %v1770, 0.1
    %v1935 = vmul.f32 %v1775, 0.1
    %v1936 = vmul.f32 %v1778, 0.1
    %v1937 = vmul.f32 %v1783, 0.1
    %v1938 = vmul.f32 %v1786, 0.1
    %v1939 = vmul.f32 %v1791, 0.1
    %v1940 = vmul.f32 %v1794, 0.1
    %v1941 = vmul.f32 %v1799, 0.1
    %v1942 = vmul.f32 %v1802, 0.1
    %v1943 = vmul.f32 %v1807, 0.1
    %v1944 = vmul.f32 %v1810, 0.1
    %v1945 = vmul.f32 %v1815, 0.1
    %v1946 = vmul.f32 %v1818, 0.1
    %v1947 = vmul.f32 %v1823, 0.1
    %v1948 = vmul.f32 %v1826, 0.1
    %v1949 = vmul.f32 %v1831, 0.1
    %v1950 = vmul.f32 %v1834, 0.1
    %v1951 = vmul.f32 %v1839, 0.1
    %v1952 = vmul.f32 %v1842, 0.1
    %v1953 = vmul.f32 %v1847, 0.1
    %v1954 = vmul.f32 %v1850, 0.1
    %v1955 = vmul.f32 %v1855, 0.1
    %v1956 = vmul.f32 %v1858, 0.1
    %v1957 = vmul.f32 %v1863, 0.1
    %v1958 = vmul.f32 %v1866, 0.1
    %v1959 = vmul.f32 %v1871, 0.1
    %v1960 = vmul.f32 %v1874, 0.1
    %v1961 = vmul.f32 %v1879, 0.1
    %v1962 = vmul.f32 %v1882, 0.1
    %v1963 = vmul.f32 %v1887, 0.1
    %v1964 = vmul.f32 %v1890, 0.1
    %v1965 = vmul.f32 %v1895, 0.1
    %v1966 = vmul.f32 %v1898, 0.1
    %v1967 = vmul.f32 %v1903, 0.1
    %v1968 = vmul.f32 %v1906, 0.1
    %v1969 = vmul.f32 %v1911, 0.1
    %v1970 = vmul.f32 %v1914, 0.1
    %v1971 = vmul.f32 %v1919, 0.1
    %v1972 = vmul.f32 %v1922, 0.1
    %v1973 = vmax.f32 %v1735, %v1925
    %v1974 = vmax.f32 %v1738, %v1926
    %v1975 = vmax.f32 %v1743, %v1927
    %v1976 = vmax.f32 %v1746, %v1928
    %v1977 = vmax.f32 %v1751, %v1929
    %v1978 = vmax.f32 %v1754, %v1930
    %v1979 = vmax.f32 %v1759, %v1931
    %v1980 = vmax.f32 %v1762, %v1932
    %v1981 = vmax.f32 %v1767, %v1933
    %v1982 = vmax.f32 %v1770, %v1934
    %v1983 = vmax.f32 %v1775, %v1935
    %v1984 = vmax.f32 %v1778, %v1936
    %v1985 = vmax.f32 %v1783, %v1937
    %v1986 = vmax.f32 %v1786, %v1938
    %v1987 = vmax.f32 %v1791, %v1939
    %v1988 = vmax.f32 %v1794, %v1940
    %v1989 = vmax.f32 %v1799, %v1941
    %v1990 = vmax.f32 %v1802, %v1942
    %v1991 = vmax.f32 %v1807, %v1943
    %v1992 = vmax.f32 %v1810, %v1944
    %v1993 = vmax.f32 %v1815, %v1945
    %v1994 = vmax.f32 %v1818, %v1946
    %v1995 = vmax.f32 %v1823, %v1947
    %v1996 = vmax.f32 %v1826, %v1948
    %v1997 = vmax.f32 %v1831, %v1949
    %v1998 = vmax.f32 %v1834, %v1950
    %v1999 = vmax.f32 %v1839, %v1951
    %v2000 = vmax.f32 %v1842, %v1952
    %v2001 = vmax.f32 %v1847, %v1953
    %v2002 = vmax.f32 %v1850, %v1954
    %v2003 = vmax.f32 %v1855, %v1955
    %v2004 = vmax.f32 %v1858, %v1956
    %v2005 = vmax.f32 %v1863, %v1957
    %v2006 = vmax.f32 %v1866, %v1958
    %v2007 = vmax.f32 %v1871, %v1959
    %v2008 = vmax.f32 %v1874, %v1960
    %v2009 = vmax.f32 %v1879, %v1961
    %v2010 = vmax.f32 %v1882, %v1962
    %v2011 = vmax.f32 %v1887, %v1963
    %v2012 = vmax.f32 %v1890, %v1964
    %v2013 = vmax.f32 %v1895, %v1965
    %v2014 = vmax.f32 %v1898, %v1966
    %v2015 = vmax.f32 %v1903, %v1967
    %v2016 = vmax.f32 %v1906, %v1968
    %v2017 = vmax.f32 %v1911, %v1969
    %v2018 = vmax.f32 %v1914, %v1970
    %v2019 = vmax.f32 %v1919, %v1971
    %v2020 = vmax.f32 %v1922, %v1972
    %v2021 = vld [vmem:[%s3] sm:$0xff]
    %2022 = vmatprep.subr.mxu0 0.0
    %2023 = vmatpush1.xpose.msra.mxu0 %v1973
    %2024 = vmatprep.subr.mxu0 0.0
    %2025 = vmatpush1.xpose.msra.mxu0 %v1974
    %2026 = vmatprep.subr.mxu0 0.0
    %2027 = vmatpush1.xpose.msra.mxu0 %v1975
    %2028 = vmatprep.subr.mxu0 0.0
    %2029 = vmatpush1.xpose.msra.mxu0 %v1976
    %2030 = vmatprep.subr.mxu0 0.0
    %2031 = vmatpush1.xpose.msra.mxu0 %v1977
    %2032 = vmatprep.subr.mxu0 0.0
    %2033 = vmatpush1.xpose.msra.mxu0 %v1978
    %2034 = vmatprep.subr.mxu0 0.0
    %2035 = vmatpush1.xpose.msra.mxu0 %v1979
    %2036 = vmatprep.subr.mxu0 0.0
    %2037 = vmatpush1.xpose.msra.mxu0 %v1980
    %2038 = vmatprep.subr.mxu0 0.0
    %2039 = vmatpush1.xpose.msra.mxu0 %v1981
    %2040 = vmatprep.subr.mxu0 0.0
    %2041 = vmatpush1.xpose.msra.mxu0 %v1982
    %2042 = vmatprep.subr.mxu0 0.0
    %2043 = vmatpush1.xpose.msra.mxu0 %v1983
    %2044 = vmatprep.subr.mxu0 0.0
    %2045 = vmatpush1.xpose.msra.mxu0 %v1984
    %2046 = vmatprep.subr.mxu0 0.0
    %2047 = vmatpush1.xpose.msra.mxu0 %v1985
    %2048 = vmatprep.subr.mxu0 0.0
    %2049 = vmatpush1.xpose.msra.mxu0 %v1986
    %2050 = vmatprep.subr.mxu0 0.0
    %2051 = vmatpush1.xpose.msra.mxu0 %v1987
    %2052 = vmatprep.subr.mxu0 0.0
    %2053 = vmatpush1.xpose.msra.mxu0 %v1988
    %2054 = vmatprep.subr.mxu0 0.0
    %2055 = vmatpush1.xpose.msra.mxu0 %v1989
    %2056 = vmatprep.subr.mxu0 0.0
    %2057 = vmatpush1.xpose.msra.mxu0 %v1990
    %2058 = vmatprep.subr.mxu0 0.0
    %2059 = vmatpush1.xpose.msra.mxu0 %v1991
    %2060 = vmatprep.subr.mxu0 0.0
    %2061 = vmatpush1.xpose.msra.mxu0 %v1992
    %2062 = vmatprep.subr.mxu0 0.0
    %2063 = vmatpush1.xpose.msra.mxu0 %v1993
    %2064 = vmatprep.subr.mxu0 0.0
    %2065 = vmatpush1.xpose.msra.mxu0 %v1994
    %2066 = vmatprep.subr.mxu0 0.0
    %2067 = vmatpush1.xpose.msra.mxu0 %v1995
    %2068 = vmatprep.subr.mxu0 0.0
    %2069 = vmatpush1.xpose.msra.mxu0 %v1996
    %2070 = vmatprep.subr.mxu0 0.0
    %2071 = vmatpush1.xpose.msra.mxu0 %v1997
    %2072 = vmatprep.subr.mxu0 0.0
    %2073 = vmatpush1.xpose.msra.mxu0 %v1998
    %2074 = vmatprep.subr.mxu0 0.0
    %2075 = vmatpush1.xpose.msra.mxu0 %v1999
    %2076 = vmatprep.subr.mxu0 0.0
    %2077 = vmatpush1.xpose.msra.mxu0 %v2000
    %2078 = vmatprep.subr.mxu0 0.0
    %2079 = vmatpush1.xpose.msra.mxu0 %v2001
    %2080 = vmatprep.subr.mxu0 0.0
    %2081 = vmatpush1.xpose.msra.mxu0 %v2002
    %2082 = vmatprep.subr.mxu0 0.0
    %2083 = vmatpush1.xpose.msra.mxu0 %v2003
    %2084 = vmatprep.subr.mxu0 0.0
    %2085 = vmatpush1.xpose.msra.mxu0 %v2004
    %2086 = vmatprep.mubr.f32.mxu0 0.0
    %2087 = vmatmul.mubr.f32.gmra.mrb[0].mxu0 %v2021
    %v2088 = vpop.f32.mrb[0].mxu0
    %v2089 = vadd.f32 0.0, %v2088
    %v2090 = vpop.f32.mrb[0].mxu0
    %v2091 = vadd.f32 0.0, %v2090
    %2092 = vdwg.mxu0
    %2093 = vmatprep.subr.mxu0 0.0
    %2094 = vmatpush1.xpose.msra.mxu0 %v2005
    %2095 = vmatprep.subr.mxu0 0.0
    %2096 = vmatpush1.xpose.msra.mxu0 %v2006
    %2097 = vmatprep.subr.mxu0 0.0
    %2098 = vmatpush1.xpose.msra.mxu0 %v2007
    %2099 = vmatprep.subr.mxu0 0.0
    %2100 = vmatpush1.xpose.msra.mxu0 %v2008
    %2101 = vmatprep.subr.mxu0 0.0
    %2102 = vmatpush1.xpose.msra.mxu0 %v2009
    %2103 = vmatprep.subr.mxu0 0.0
    %2104 = vmatpush1.xpose.msra.mxu0 %v2010
    %2105 = vmatprep.subr.mxu0 0.0
    %2106 = vmatpush1.xpose.msra.mxu0 %v2011
    %2107 = vmatprep.subr.mxu0 0.0
    %2108 = vmatpush1.xpose.msra.mxu0 %v2012
    %2109 = vmatprep.subr.mxu0 0.0
    %2110 = vmatpush1.xpose.msra.mxu0 %v2013
    %2111 = vmatprep.subr.mxu0 0.0
    %2112 = vmatpush1.xpose.msra.mxu0 %v2014
    %2113 = vmatprep.subr.mxu0 0.0
    %2114 = vmatpush1.xpose.msra.mxu0 %v2015
    %2115 = vmatprep.subr.mxu0 0.0
    %2116 = vmatpush1.xpose.msra.mxu0 %v2016
    %2117 = vmatprep.subr.mxu0 0.0
    %2118 = vmatpush1.xpose.msra.mxu0 %v2017
    %2119 = vmatprep.subr.mxu0 0.0
    %2120 = vmatpush1.xpose.msra.mxu0 %v2018
    %2121 = vmatprep.subr.mxu0 0.0
    %2122 = vmatpush1.xpose.msra.mxu0 %v2019
    %2123 = vmatprep.subr.mxu0 0.0
    %2124 = vmatpush1.xpose.msra.mxu0 %v2020
    %2125 = vmatprep.subr.mxu0 0.0
    %2126 = vmatpush1.xpose.msra.mxu0 0.0
    %2127 = vmatprep.subr.mxu0 0.0
    %2128 = vmatpush1.xpose.msra.mxu0 0.0
    %2129 = vmatprep.subr.mxu0 0.0
    %2130 = vmatpush1.xpose.msra.mxu0 0.0
    %2131 = vmatprep.subr.mxu0 0.0
    %2132 = vmatpush1.xpose.msra.mxu0 0.0
    %2133 = vmatprep.subr.mxu0 0.0
    %2134 = vmatpush1.xpose.msra.mxu0 0.0
    %2135 = vmatprep.subr.mxu0 0.0
    %2136 = vmatpush1.xpose.msra.mxu0 0.0
    %2137 = vmatprep.subr.mxu0 0.0
    %2138 = vmatpush1.xpose.msra.mxu0 0.0
    %2139 = vmatprep.subr.mxu0 0.0
    %2140 = vmatpush1.xpose.msra.mxu0 0.0
    %2141 = vmatprep.subr.mxu0 0.0
    %2142 = vmatpush1.xpose.msra.mxu0 0.0
    %2143 = vmatprep.subr.mxu0 0.0
    %2144 = vmatpush1.xpose.msra.mxu0 0.0
    %2145 = vmatprep.subr.mxu0 0.0
    %2146 = vmatpush1.xpose.msra.mxu0 0.0
    %2147 = vmatprep.subr.mxu0 0.0
    %2148 = vmatpush1.xpose.msra.mxu0 0.0
    %2149 = vmatprep.subr.mxu0 0.0
    %2150 = vmatpush1.xpose.msra.mxu0 0.0
    %2151 = vmatprep.subr.mxu0 0.0
    %2152 = vmatpush1.xpose.msra.mxu0 0.0
    %2153 = vmatprep.subr.mxu0 0.0
    %2154 = vmatpush1.xpose.msra.mxu0 0.0
    %2155 = vmatprep.subr.mxu0 0.0
    %2156 = vmatpush1.xpose.msra.mxu0 0.0
    %2157 = vmatprep.mubr.f32.mxu0 0.0
    %2158 = vmatmul.mubr.f32.gmra.mrb[0].mxu0 %v2021
    %v2159 = vpop.f32.mrb[0].mxu0
    %v2160 = vadd.f32 0.0, %v2159
    %v2161 = vpop.f32.mrb[0].mxu0
    %2162 = vdwg.mxu0
    %s2163 = sld [smem:[#allocation2]]
    %v2164 = vstv %s2163
    %v2165 = vadd.f32 %v2089, %v2164
    %v2166 = vadd.f32 %v2091, %v2164
    %v2167 = vadd.f32 %v2160, %v2164
    %v2168 = vsub.f32 0.0, %v2165
    %v2169 = vsub.f32 0.0, %v2166
    %v2170 = vsub.f32 0.0, %v2167
    %v2171 = vmul.f32 %v2168, 1.442695
    %v2172 = vpow.pop %v2171
    %v2173 = vmul.f32 %v2169, 1.442695
    %v2174 = vpow.pop %v2173
    %v2175 = vmul.f32 %v2170, 1.442695
    %v2176 = vpow.pop %v2175
    %v2177 = vadd.f32 %v2172, 1.0
    %v2178 = vadd.f32 %v2174, 1.0
    %v2179 = vadd.f32 %v2176, 1.0
    %v2180 = vrcp.pop %v2177
    %v2181 = vrcp.pop %v2178
    %v2182 = vrcp.pop %v2179
    %v2186 = vcombine.low %v2180, %v2181
    %v2188 = vunpack.c.l.s4 1966171168
    %v2189 = vunpack.c.0.s8 %v2188
    %v2190 = vlaneseq
    %v2191 = vshrl.u32 %v2190, 7
    %v2192 = vsub.s32 %v2189, %v2191
    %v2193 = vrot.slane %v2186, %v2192
    %v2195 = vunpack.c.l.s4 1966171168
    %v2196 = vunpack.c.0.s8 %v2195
    %v2197 = vlaneseq
    %v2198 = vshrl.u32 %v2197, 7
    %v2199 = vsub.s32 %v2196, %v2198
    %v2200 = vrot.slane %v2182, %v2199
    %v2201 = vcombine.low %v2193, %v2200
    %v2203 = vunpack.c.l.s4 1966171168
    %v2204 = vunpack.c.0.s8 %v2203
    %v2205 = vlaneseq
    %v2206 = vshrl.u32 %v2205, 7
    %v2207 = vsub.s32 %v2204, %v2206
    %v2208 = vrot.slane %v2201, %v2207
    %v2210 = vlaneseq
    %vm2211 = vcmp.ge.s32.totalorder %v2210, 0
    %vm2212 = vcmp.lt.s32.totalorder %v2210, 384
    %vm2213 = vmand %vm2211, %vm2212
    %2214 = vst.msk [vmem:[#allocation8] sm:$0x7] %vm2213, %v2208
    // Predicated region
    $region30: #{discriminator_forward.1} parent=1 // pred_check
      _
    $region31: #{discriminator_forward.1} parent=1 // pred_check_branch
      %2216 = sbr.rel (0) target = $region33
    $region32: #{discriminator_forward.1} parent=1 // pred_region
      %s2218 = ssub.s32 48, 48
      %2219 = vsyncadd [#allocation5], %s2218
      %s2221 = sshll.u32 [#allocation8], 4
      %s2222 = int_to_ptr.vmem [resolvable:$true] %s2221
      %2224 = dma.vmem_to_hbm [thread:$0]  %s2222, 48, %s5, [#allocation5]
    $region33: #{discriminator_forward.1} parent=1 // pred_fallthru
      _
    // Predicated region
    $region34: #{discriminator_forward.1} parent=1 // pred_check
      _
    $region35: #{discriminator_forward.1} parent=1 // pred_check_branch
      %2226 = sbr.rel (0) target = $region37
    $region36: #{discriminator_forward.1} parent=1 // pred_region
      %2227 = dma.done [#allocation5], 48
    $region37: #{discriminator_forward.1} parent=1 // pred_fallthru
      _
    %2228 = vsyncpa [#allocation4], 1
    %2229 = vsyncpa [#allocation7], 1
    %2230 = vsyncpa [#allocation5], 1

</llo_original>
